<compile_context>
chip_gen: v7x
topology: tpu7x:2x2x1
jax: 0.10.0
libtpu: 0.0.40
codegen_flags: <defaults>
</compile_context>

<pallas_src>
import functools

import jax
import jax.numpy as jnp
import numpy as np
from jax.experimental import pallas as pl
from jax.experimental.pallas import tpu as pltpu

HIDDEN = 512
LANE = 128
SUBLANE_BF16 = 16


def _round_up(x, m):
    return (x + m - 1) // m * m


def _leaky_relu(x, slope=0.2):
    return jnp.where(x >= 0, x, slope * x)


def _softplus_beta(x, beta=0.5, threshold=20.0):
    # PyTorch Softplus(beta): (1/beta)*log(1+exp(beta*x)); linear above threshold.
    bx = beta * x
    safe = jnp.minimum(bx, threshold)            # keep the un-selected branch finite
    return jnp.where(bx > threshold, x, (1.0 / beta) * jnp.log1p(jnp.exp(safe)))


def _use_bf16_softplus():
    # bf16 EUP path exists on v6e / v7x; keep f32 elsewhere (e.g. v5e has no bf16 EUP).
    try:
        kind = jax.devices()[0].device_kind.lower()
    except Exception:
        return False
    return ("v6" in kind) or ("v7" in kind)


def _disc_kernel(flat_ref, h1b_ref,
                 w1i_ref,
                 w2_ref, b2_ref,
                 w3_ref, b3_ref,
                 w4_ref, b4_ref,
                 out_ref, *, bf16_softplus):
    # Layer 1: concat(img, emb) @ W1 + b1 == flat @ W1_img + (emb @ W1_emb + b1).
    # The second term is a precomputed per-label table gathered in the wrapper.
    flat = flat_ref[...].astype(jnp.bfloat16)        # in-kernel cast: no bf16 HBM copy
    h1 = jnp.dot(flat, w1i_ref[...], preferred_element_type=jnp.float32)
    h1 = _leaky_relu(h1 + h1b_ref[...])

    h2 = jnp.dot(h1.astype(jnp.bfloat16), w2_ref[...],
                 preferred_element_type=jnp.float32) + b2_ref[...]
    # TODO(synk): Dropout(0.4) implemented as identity (eval-mode semantics).
    h2 = _leaky_relu(h2)

    z3 = jnp.dot(h2.astype(jnp.bfloat16), w3_ref[...],
                 preferred_element_type=jnp.float32) + b3_ref[...]
    if bf16_softplus:
        z3 = z3.astype(jnp.bfloat16)                 # bf16 EUP path (v6e / v7x only)
    h3 = _softplus_beta(z3, beta=0.5).astype(jnp.float32)

    # Layer 4 (512 -> 1): VPU multiply + XLU lane reduce. Avoids a padded N=128 MXU
    # pass and shrinks the output write to tb*4 bytes per step.
    logit = jnp.sum(h3 * w4_ref[...], axis=-1, keepdims=True) + b4_ref[...]
    out_ref[...] = logit.astype(out_ref.dtype)


def prepare_params(params, num_classes, shape):
    """One-time parameter prep (outside the per-call hot path):
      * split W1 into image / embedding halves, pad the image half to a lane multiple,
      * fold Embedding lookup -> (emb @ W1_emb) + b1 into a (num_classes, 512) f32
        table (gathered per label in the wrapper: one fewer matmul in the kernel),
      * cast MXU weights to bf16; keep the 512->1 head as an f32 row for the VPU."""
    img_dim = int(np.prod(shape))
    d_img_pad = _round_up(img_dim, LANE)

    w1 = params["w1"]                                    # (img_dim + num_classes, 512)
    w1_img = w1[:img_dim]
    if d_img_pad != img_dim:
        w1_img = jnp.pad(w1_img, ((0, d_img_pad - img_dim), (0, 0)))
    l1_table = params["emb"] @ w1[img_dim:] + params["b1"]   # (num_classes, 512) f32

    return {
        "l1_table": l1_table,
        "w1_img": w1_img.astype(jnp.bfloat16),
        "w2": params["w2"].astype(jnp.bfloat16), "b2": params["b2"],
        "w3": params["w3"].astype(jnp.bfloat16), "b3": params["b3"],
        "w4_row": params["w4"].T, "b4": params["b4"],        # (1, 512), (1, 1) f32
    }


@jax.jit
def discriminator_forward(img, labels, p):
    """img: (B, C, H, W) float32, labels: (B,) int32, p: prepare_params output."""
    B = img.shape[0]
    img_dim = int(np.prod(img.shape[1:]))
    d_img_pad = p["w1_img"].shape[0]

    flat = img.reshape(B, img_dim)                       # stays f32 (cast inside kernel)
    if d_img_pad != img_dim:
        flat = jnp.pad(flat, ((0, 0), (0, d_img_pad - img_dim)))
    h1_bias = jnp.take(p["l1_table"], labels, axis=0)    # (B, 512) f32: emb@W1_emb + b1

    # Batch tile: multiple of 16 (bf16 sublane pack), capped at 512; force >=2 grid
    # steps when the batch allows it so both v7x TensorCores get work.
    tb = min(512, _round_up(B, SUBLANE_BF16))
    if B >= 2 * SUBLANE_BF16 and pl.cdiv(B, tb) < 2:
        tb = _round_up(-(-B // 2), SUBLANE_BF16)
    b_pad = _round_up(B, tb)
    if b_pad != B:
        flat = jnp.pad(flat, ((0, b_pad - B), (0, 0)))
        h1_bias = jnp.pad(h1_bias, ((0, b_pad - B), (0, 0)))
    grid = (b_pad // tb,)

    row_spec = lambda cols: pl.BlockSpec((tb, cols), lambda i: (i, 0))
    fixed = lambda shape: pl.BlockSpec(shape, lambda i: (0, 0))   # VMEM-resident weights

    # Right-size the VMEM budget: double-buffered activations/output + weights + slack.
    act_bytes = 2 * tb * (d_img_pad * 4 + HIDDEN * 4 + 4)
    wgt_bytes = 2 * (2 * (p["w1_img"].size + p["w2"].size + p["w3"].size)
                     + 4 * (p["b2"].size + p["b3"].size + p["w4_row"].size + p["b4"].size))
    vmem_limit = min(int(act_bytes + wgt_bytes) + (4 << 20), 64 << 20)

    flops = 2 * b_pad * (d_img_pad * HIDDEN + 2 * HIDDEN * HIDDEN + HIDDEN)
    bytes_accessed = int(
        b_pad * d_img_pad * 4 + b_pad * HIDDEN * 4 + b_pad * 4
        + 2 * (p["w1_img"].size + p["w2"].size + p["w3"].size)
        + 4 * (p["b2"].size + p["b3"].size + p["w4_row"].size + p["b4"].size))

    kernel = functools.partial(_disc_kernel, bf16_softplus=_use_bf16_softplus())

    out_p = pl.pallas_call(
        kernel,
        out_shape=jax.ShapeDtypeStruct((b_pad, 1), jnp.float32),
        grid=grid,
        in_specs=[
            row_spec(d_img_pad), row_spec(HIDDEN),
            fixed((d_img_pad, HIDDEN)),
            fixed((HIDDEN, HIDDEN)), fixed((1, HIDDEN)),
            fixed((HIDDEN, HIDDEN)), fixed((1, HIDDEN)),
            fixed((1, HIDDEN)), fixed((1, 1)),
        ],
        out_specs=pl.BlockSpec((tb, 1), lambda i: (i, 0)),
        compiler_params=pltpu.CompilerParams(
            dimension_semantics=("parallel",),
            vmem_limit_bytes=vmem_limit),
        cost_estimate=pl.CostEstimate(
            flops=flops,
            transcendentals=2 * b_pad * HIDDEN,
            bytes_accessed=bytes_accessed),
    )(flat, h1_bias,
      p["w1_img"],
      p["w2"], p["b2"],
      p["w3"], p["b3"],
      p["w4_row"], p["b4"])

    return out_p[:B]                                     # (B, 1) validity


def init_params(key, num_classes, shape):
    """Deterministic synthetic parameters matching the PyTorch module shapes."""
    d_in_dim = num_classes + int(np.prod(shape))
    ks = jax.random.split(key, 9)
    scale = lambda fan_in: 1.0 / jnp.sqrt(jnp.float32(fan_in))
    return {
        "emb": jax.random.normal(ks[0], (num_classes, num_classes), jnp.float32),
        "w1": jax.random.normal(ks[1], (d_in_dim, HIDDEN), jnp.float32) * scale(d_in_dim),
        "b1": jax.random.normal(ks[2], (1, HIDDEN), jnp.float32) * 0.01,
        "w2": jax.random.normal(ks[3], (HIDDEN, HIDDEN), jnp.float32) * scale(HIDDEN),
        "b2": jax.random.normal(ks[4], (1, HIDDEN), jnp.float32) * 0.01,
        "w3": jax.random.normal(ks[5], (HIDDEN, HIDDEN), jnp.float32) * scale(HIDDEN),
        "b3": jax.random.normal(ks[6], (1, HIDDEN), jnp.float32) * 0.01,
        "w4": jax.random.normal(ks[7], (HIDDEN, 1), jnp.float32) * scale(HIDDEN),
        "b4": jax.random.normal(ks[8], (1, 1), jnp.float32) * 0.01,
    }


if __name__ == "__main__":
    key = jax.random.PRNGKey(0)
    k_img, k_lbl, k_par = jax.random.split(key, 3)

    num_classes = 10
    shape = (1, 16, 16)          # (C, H, W) of the "image"
    B = 2

    img = jax.random.normal(k_img, (B,) + shape, jnp.float32)          # NCHW
    labels = jax.random.randint(k_lbl, (B,), 0, num_classes, jnp.int32)
    params = init_params(k_par, num_classes, shape)
    prepped = prepare_params(params, num_classes, shape)               # once

    validity = discriminator_forward(img, labels, prepped)
    validity = jax.block_until_ready(validity)
    assert validity.shape == (B, 1), validity.shape
    print("KERNEL_OK")
</pallas_src>

<mosaic_0001>
module attributes {stable_mosaic.version = 11 : i64} {
  func.func @_disc_kernel(%arg0: i32, %arg1: memref<16x256xf32, #tpu.memory_space<vmem>>, %arg2: memref<16x512xf32, #tpu.memory_space<vmem>>, %arg3: memref<256x512xbf16, #tpu.memory_space<vmem>>, %arg4: memref<512x512xbf16, #tpu.memory_space<vmem>>, %arg5: memref<1x512xf32, #tpu.memory_space<vmem>>, %arg6: memref<512x512xbf16, #tpu.memory_space<vmem>>, %arg7: memref<1x512xf32, #tpu.memory_space<vmem>>, %arg8: memref<1x512xf32, #tpu.memory_space<vmem>>, %arg9: memref<1x1xf32, #tpu.memory_space<vmem>>, %arg10: memref<16x1xf32, #tpu.memory_space<vmem>>) attributes {dimension_semantics = [#tpu.dimension_semantics<parallel>], iteration_bounds = array<i64: 1>, scalar_prefetch = 0 : i64, scratch_operands = 0 : i64, tpu.core_type = #tpu.core_type<tc>, window_params = [{transform_indices = @transform_0, window_bounds = array<i64: 16, 256>}, {transform_indices = @transform_1, window_bounds = array<i64: 16, 512>}, {pipeline_mode = #tpu.pipeline_mode<synchronous>, transform_indices = @transform_2, window_bounds = array<i64: 256, 512>}, {pipeline_mode = #tpu.pipeline_mode<synchronous>, transform_indices = @transform_3, window_bounds = array<i64: 512, 512>}, {pipeline_mode = #tpu.pipeline_mode<synchronous>, transform_indices = @transform_4, window_bounds = array<i64: 1, 512>}, {pipeline_mode = #tpu.pipeline_mode<synchronous>, transform_indices = @transform_5, window_bounds = array<i64: 512, 512>}, {pipeline_mode = #tpu.pipeline_mode<synchronous>, transform_indices = @transform_6, window_bounds = array<i64: 1, 512>}, {pipeline_mode = #tpu.pipeline_mode<synchronous>, transform_indices = @transform_7, window_bounds = array<i64: 1, 512>}, {pipeline_mode = #tpu.pipeline_mode<synchronous>, transform_indices = @transform_8, window_bounds = array<i64: 1, 1>}, {transform_indices = @transform_9, window_bounds = array<i64: 16, 1>}]} {
    %c0 = arith.constant 0 : index
    %c0_0 = arith.constant 0 : index
    %0 = vector.load %arg1[%c0, %c0_0] : memref<16x256xf32, #tpu.memory_space<vmem>>, vector<16x256xf32>
    %1 = arith.truncf %0 : vector<16x256xf32> to vector<16x256xbf16>
    %c0_1 = arith.constant 0 : index
    %c0_2 = arith.constant 0 : index
    %2 = vector.load %arg3[%c0_1, %c0_2] : memref<256x512xbf16, #tpu.memory_space<vmem>>, vector<256x512xbf16>
    %cst = arith.constant dense<0.000000e+00> : vector<16x512xf32>
    %3 = tpu.matmul %1, %2, %cst {dimension_numbers = #tpu.dot_dimension_numbers<[1], [0], [0], [1], [0, 0, 1, 1], [], []>} : vector<16x256xbf16>, vector<256x512xbf16>, vector<16x512xf32> -> vector<16x512xf32>
    %c0_3 = arith.constant 0 : index
    %c0_4 = arith.constant 0 : index
    %4 = vector.load %arg2[%c0_3, %c0_4] : memref<16x512xf32, #tpu.memory_space<vmem>>, vector<16x512xf32>
    %5 = arith.addf %3, %4 : vector<16x512xf32>
    %cst_5 = arith.constant 0.000000e+00 : f32
    %6 = vector.broadcast %cst_5 : f32 to vector<16x512xf32>
    %7 = arith.cmpf oge, %5, %6 : vector<16x512xf32>
    %cst_6 = arith.constant 2.000000e-01 : f32
    %8 = vector.broadcast %cst_6 : f32 to vector<16x512xf32>
    %9 = arith.mulf %8, %5 : vector<16x512xf32>
    %10 = arith.select %7, %5, %9 : vector<16x512xi1>, vector<16x512xf32>
    %11 = arith.truncf %10 : vector<16x512xf32> to vector<16x512xbf16>
    %c0_7 = arith.constant 0 : index
    %c0_8 = arith.constant 0 : index
    %12 = vector.load %arg4[%c0_7, %c0_8] : memref<512x512xbf16, #tpu.memory_space<vmem>>, vector<512x512xbf16>
    %cst_9 = arith.constant dense<0.000000e+00> : vector<16x512xf32>
    %13 = tpu.matmul %11, %12, %cst_9 {dimension_numbers = #tpu.dot_dimension_numbers<[1], [0], [0], [1], [0, 0, 1, 1], [], []>} : vector<16x512xbf16>, vector<512x512xbf16>, vector<16x512xf32> -> vector<16x512xf32>
    %c0_10 = arith.constant 0 : index
    %c0_11 = arith.constant 0 : index
    %14 = vector.load %arg5[%c0_10, %c0_11] : memref<1x512xf32, #tpu.memory_space<vmem>>, vector<1x512xf32>
    %15 = vector.broadcast %14 : vector<1x512xf32> to vector<16x512xf32>
    %16 = arith.addf %13, %15 : vector<16x512xf32>
    %cst_12 = arith.constant 0.000000e+00 : f32
    %17 = vector.broadcast %cst_12 : f32 to vector<16x512xf32>
    %18 = arith.cmpf oge, %16, %17 : vector<16x512xf32>
    %cst_13 = arith.constant 2.000000e-01 : f32
    %19 = vector.broadcast %cst_13 : f32 to vector<16x512xf32>
    %20 = arith.mulf %19, %16 : vector<16x512xf32>
    %21 = arith.select %18, %16, %20 : vector<16x512xi1>, vector<16x512xf32>
    %22 = arith.truncf %21 : vector<16x512xf32> to vector<16x512xbf16>
    %c0_14 = arith.constant 0 : index
    %c0_15 = arith.constant 0 : index
    %23 = vector.load %arg6[%c0_14, %c0_15] : memref<512x512xbf16, #tpu.memory_space<vmem>>, vector<512x512xbf16>
    %cst_16 = arith.constant dense<0.000000e+00> : vector<16x512xf32>
    %24 = tpu.matmul %22, %23, %cst_16 {dimension_numbers = #tpu.dot_dimension_numbers<[1], [0], [0], [1], [0, 0, 1, 1], [], []>} : vector<16x512xbf16>, vector<512x512xbf16>, vector<16x512xf32> -> vector<16x512xf32>
    %c0_17 = arith.constant 0 : index
    %c0_18 = arith.constant 0 : index
    %25 = vector.load %arg7[%c0_17, %c0_18] : memref<1x512xf32, #tpu.memory_space<vmem>>, vector<1x512xf32>
    %26 = vector.broadcast %25 : vector<1x512xf32> to vector<16x512xf32>
    %27 = arith.addf %24, %26 : vector<16x512xf32>
    %cst_19 = arith.constant 5.000000e-01 : f32
    %28 = vector.broadcast %cst_19 : f32 to vector<16x512xf32>
    %29 = arith.mulf %28, %27 : vector<16x512xf32>
    %cst_20 = arith.constant 2.000000e+01 : f32
    %30 = vector.broadcast %cst_20 : f32 to vector<16x512xf32>
    %31 = arith.minimumf %29, %30 : vector<16x512xf32>
    %cst_21 = arith.constant 2.000000e+01 : f32
    %32 = vector.broadcast %cst_21 : f32 to vector<16x512xf32>
    %33 = arith.cmpf ogt, %29, %32 : vector<16x512xf32>
    %34 = math.exp %31 : vector<16x512xf32>
    %35 = math.log1p %34 : vector<16x512xf32>
    %cst_22 = arith.constant 2.000000e+00 : f32
    %36 = vector.broadcast %cst_22 : f32 to vector<16x512xf32>
    %37 = arith.mulf %36, %35 : vector<16x512xf32>
    %38 = arith.select %33, %27, %37 : vector<16x512xi1>, vector<16x512xf32>
    %c0_23 = arith.constant 0 : index
    %c0_24 = arith.constant 0 : index
    %39 = vector.load %arg8[%c0_23, %c0_24] : memref<1x512xf32, #tpu.memory_space<vmem>>, vector<1x512xf32>
    %40 = vector.broadcast %39 : vector<1x512xf32> to vector<16x512xf32>
    %41 = arith.mulf %38, %40 : vector<16x512xf32>
    %cst_25 = arith.constant dense<0.000000e+00> : vector<16xf32>
    %42 = vector.multi_reduction <add>, %41, %cst_25 [1] : vector<16x512xf32> to vector<16xf32>
    %43 = vector.shape_cast %42 : vector<16xf32> to vector<16x1xf32>
    %c0_26 = arith.constant 0 : index
    %c0_27 = arith.constant 0 : index
    %44 = vector.load %arg9[%c0_26, %c0_27] : memref<1x1xf32, #tpu.memory_space<vmem>>, vector<1x1xf32>
    %45 = vector.broadcast %44 : vector<1x1xf32> to vector<16x1xf32>
    %46 = arith.addf %43, %45 : vector<16x1xf32>
    %c0_28 = arith.constant 0 : index
    %c0_29 = arith.constant 0 : index
    %47 = vector.load %arg10[%c0_28, %c0_29] : memref<16x1xf32, #tpu.memory_space<vmem>>, vector<16x1xf32>
    tpu.vector_store %arg10[%c0_28, %c0_29], %46 {strides = array<i32>} : memref<16x1xf32, #tpu.memory_space<vmem>>, vector<16x1xf32>,
    return
  }
  func.func @transform_0(%arg0: i32) -> (i32, i32) {
    %c0_i32 = arith.constant 0 : i32
    %c0_i32_0 = arith.constant 0 : i32
    return %arg0, %c0_i32 : i32, i32
  }
  func.func @transform_1(%arg0: i32) -> (i32, i32) {
    %c0_i32 = arith.constant 0 : i32
    %c0_i32_0 = arith.constant 0 : i32
    return %arg0, %c0_i32 : i32, i32
  }
  func.func @transform_2(%arg0: i32) -> (i32, i32) {
    %c0_i32 = arith.constant 0 : i32
    %c0_i32_0 = arith.constant 0 : i32
    %c0_i32_1 = arith.constant 0 : i32
    return %c0_i32, %c0_i32_0 : i32, i32
  }
  func.func @transform_3(%arg0: i32) -> (i32, i32) {
    %c0_i32 = arith.constant 0 : i32
    %c0_i32_0 = arith.constant 0 : i32
    %c0_i32_1 = arith.constant 0 : i32
    return %c0_i32, %c0_i32_0 : i32, i32
  }
  func.func @transform_4(%arg0: i32) -> (i32, i32) {
    %c0_i32 = arith.constant 0 : i32
    %c0_i32_0 = arith.constant 0 : i32
    %c0_i32_1 = arith.constant 0 : i32
    return %c0_i32, %c0_i32_0 : i32, i32
  }
  func.func @transform_5(%arg0: i32) -> (i32, i32) {
    %c0_i32 = arith.constant 0 : i32
    %c0_i32_0 = arith.constant 0 : i32
    %c0_i32_1 = arith.constant 0 : i32
    return %c0_i32, %c0_i32_0 : i32, i32
  }
  func.func @transform_6(%arg0: i32) -> (i32, i32) {
    %c0_i32 = arith.constant 0 : i32
    %c0_i32_0 = arith.constant 0 : i32
    %c0_i32_1 = arith.constant 0 : i32
    return %c0_i32, %c0_i32_0 : i32, i32
  }
  func.func @transform_7(%arg0: i32) -> (i32, i32) {
    %c0_i32 = arith.constant 0 : i32
    %c0_i32_0 = arith.constant 0 : i32
    %c0_i32_1 = arith.constant 0 : i32
    return %c0_i32, %c0_i32_0 : i32, i32
  }
  func.func @transform_8(%arg0: i32) -> (i32, i32) {
    %c0_i32 = arith.constant 0 : i32
    %c0_i32_0 = arith.constant 0 : i32
    %c0_i32_1 = arith.constant 0 : i32
    return %c0_i32, %c0_i32_0 : i32, i32
  }
  func.func @transform_9(%arg0: i32) -> (i32, i32) {
    %c0_i32 = arith.constant 0 : i32
    %c0_i32_0 = arith.constant 0 : i32
    return %arg0, %c0_i32 : i32, i32
  }
}

</mosaic_0001>

<llo_original>
// kernel: discriminator_forward.1
$region0: #{discriminator_forward.1}
  #allocation0 [shape = 'u32[]', space=smem, size = 0x4, offset = 0x4, fixed_abs, tag = 'smem constant byte address 0x4 - core index']
  #allocation1 [shape = 'u32[144,128]{1,0:T(1,128)}', space=vmem, size = 0x12000, scoped, tag = 'internal scratch']
  #allocation2 [shape = 'f32[1,1]{1,0:T(1,128)S(1)}', space=vmem, size = 0x200, scoped, tag = 'scoped memory for discriminator_forward.1']
  %s0 = inlined_call_operand.vmem [shape: f32[16,256], index: 0, kind: input, shape index: {}]
  %s1 = inlined_call_operand.vmem [shape: f32[16,512], index: 1, kind: input, shape index: {}]
  %s2 = inlined_call_operand.hbm [shape: bf16[256,512], index: 2, kind: input, shape index: {}]
  %s3 = inlined_call_operand.hbm [shape: bf16[512,512], index: 3, kind: input, shape index: {}]
  %s4 = inlined_call_operand.vmem [shape: f32[1,512], index: 4, kind: input, shape index: {}]
  %s5 = inlined_call_operand.hbm [shape: bf16[512,512], index: 5, kind: input, shape index: {}]
  %s6 = inlined_call_operand.vmem [shape: f32[1,512], index: 6, kind: input, shape index: {}]
  %s7 = inlined_call_operand.vmem [shape: f32[1,512], index: 7, kind: input, shape index: {}]
  %s8 = inlined_call_operand.<no memory space> [shape: f32[1,1], index: 8, kind: input, shape index: {}]
  %s9 = inlined_call_operand.vmem [shape: f32[16,1], index: 9, kind: output, shape index: {}]
  %s10 = sld [smem:[#allocation0]]
  $region58: #{discriminator_forward.1} parent=0
    _
  %s12 = ssub.s32 1, %s10
  %s13 = scalar_select 0, %s12, %s10
  %v14 = vstv %s8
  %15 = vst [vmem:[#allocation2] sm:$0x1] %v14
  $region1: #{discriminator_forward.1} parent=0
    #allocation3 [shape = 'u8[262144]{0}', space=vmem, size = 0x40000, scoped, tag = 'input window, operand 2, single buffered']
    #allocation4 [shape = 's32[1]{0}', space=sflag, size = 0x4, scoped, tag = 'scoped memory for discriminator_forward.1']
    #allocation5 [shape = 'u8[524288]{0}', space=vmem, size = 0x80000, scoped, tag = 'input window, operand 3, single buffered']
    #allocation6 [shape = 's32[1]{0}', space=sflag, size = 0x4, scoped, tag = 'scoped memory for discriminator_forward.1']
    #allocation7 [shape = 'u8[524288]{0}', space=vmem, size = 0x80000, scoped, tag = 'input window, operand 5, single buffered']
    %16 = vsyncpa [#allocation4], 0
    %17 = vsyncpa [#allocation6], 0
    // Predicated region
    $region2: #{discriminator_forward.1} parent=1 // pred_check
      _
    $region3: #{discriminator_forward.1} parent=1 // pred_check_branch
      %19 = sbr.rel (0) target = $region5
    $region4: #{discriminator_forward.1} parent=1 // pred_region
      _
    $region5: #{discriminator_forward.1} parent=1 // pred_fallthru
      _
    // Predicated region
    $region6: #{discriminator_forward.1} parent=1 // pred_check
      _
    $region7: #{discriminator_forward.1} parent=1 // pred_check_branch
      %21 = sbr.rel (0) target = $region9
    $region8: #{discriminator_forward.1} parent=1 // pred_region
      _
    $region9: #{discriminator_forward.1} parent=1 // pred_fallthru
      _
    // Predicated region
    $region10: #{discriminator_forward.1} parent=1 // pred_check
      _
    $region11: #{discriminator_forward.1} parent=1 // pred_check_branch
      %23 = sbr.rel (0) target = $region13
    $region12: #{discriminator_forward.1} parent=1 // pred_region
      %s25 = ssub.s32 8192, 8192
      %26 = vsyncadd [#allocation4], %s25
      %s27 = sshll.u32 [#allocation3], 4
      %s28 = int_to_ptr.vmem [resolvable:$true] %s27
      %33 = dma.hbm_to_vmem [thread:$0]  %s2, 8192, %s28, [#allocation4], 256, 256, 16
    $region13: #{discriminator_forward.1} parent=1 // pred_fallthru
      _
    // Predicated region
    $region14: #{discriminator_forward.1} parent=1 // pred_check
      _
    $region15: #{discriminator_forward.1} parent=1 // pred_check_branch
      %35 = sbr.rel (0) target = $region17
    $region16: #{discriminator_forward.1} parent=1 // pred_region
      %s37 = ssub.s32 16384, 16384
      %38 = vsyncadd [#allocation6], %s37
      %s39 = sshll.u32 [#allocation5], 4
      %s40 = int_to_ptr.vmem [resolvable:$true] %s39
      %45 = dma.hbm_to_vmem [thread:$0]  %s3, 16384, %s40, [#allocation6], 256, 256, 16
    $region17: #{discriminator_forward.1} parent=1 // pred_fallthru
      _
    // Predicated region
    $region18: #{discriminator_forward.1} parent=1 // pred_check
      _
    $region19: #{discriminator_forward.1} parent=1 // pred_check_branch
      %47 = sbr.rel (0) target = $region21
    $region20: #{discriminator_forward.1} parent=1 // pred_region
      _
    $region21: #{discriminator_forward.1} parent=1 // pred_fallthru
      _
    // Predicated region
    $region22: #{discriminator_forward.1} parent=1 // pred_check
      _
    $region23: #{discriminator_forward.1} parent=1 // pred_check_branch
      %49 = sbr.rel (0) target = $region25
    $region24: #{discriminator_forward.1} parent=1 // pred_region
      %s51 = ssub.s32 16384, 16384
      %52 = vsyncadd [#allocation6], %s51
      %s53 = sshll.u32 [#allocation7], 4
      %s54 = int_to_ptr.vmem [resolvable:$true] %s53
      %59 = dma.hbm_to_vmem [thread:$0]  %s5, 16384, %s54, [#allocation6], 256, 256, 16
    $region25: #{discriminator_forward.1} parent=1 // pred_fallthru
      _
    // Predicated region
    $region26: #{discriminator_forward.1} parent=1 // pred_check
      _
    $region27: #{discriminator_forward.1} parent=1 // pred_check_branch
      %61 = sbr.rel (0) target = $region29
    $region28: #{discriminator_forward.1} parent=1 // pred_region
      _
    $region29: #{discriminator_forward.1} parent=1 // pred_fallthru
      _
    // Predicated region
    $region30: #{discriminator_forward.1} parent=1 // pred_check
      _
    $region31: #{discriminator_forward.1} parent=1 // pred_check_branch
      %63 = sbr.rel (0) target = $region33
    $region32: #{discriminator_forward.1} parent=1 // pred_region
      _
    $region33: #{discriminator_forward.1} parent=1 // pred_fallthru
      _
    // Predicated region
    $region34: #{discriminator_forward.1} parent=1 // pred_check
      _
    $region35: #{discriminator_forward.1} parent=1 // pred_check_branch
      %65 = sbr.rel (0) target = $region37
    $region36: #{discriminator_forward.1} parent=1 // pred_region
      _
    $region37: #{discriminator_forward.1} parent=1 // pred_fallthru
      _
    // Predicated region
    $region38: #{discriminator_forward.1} parent=1 // pred_check
      _
    $region39: #{discriminator_forward.1} parent=1 // pred_check_branch
      %67 = sbr.rel (0) target = $region41
    $region40: #{discriminator_forward.1} parent=1 // pred_region
      %68 = dma.done [#allocation4], 8192
    $region41: #{discriminator_forward.1} parent=1 // pred_fallthru
      _
    // Predicated region
    $region42: #{discriminator_forward.1} parent=1 // pred_check
      _
    $region43: #{discriminator_forward.1} parent=1 // pred_check_branch
      %70 = sbr.rel (0) target = $region45
    $region44: #{discriminator_forward.1} parent=1 // pred_region
      %71 = dma.done [#allocation6], 16384
    $region45: #{discriminator_forward.1} parent=1 // pred_fallthru
      _
    // Predicated region
    $region46: #{discriminator_forward.1} parent=1 // pred_check
      _
    $region47: #{discriminator_forward.1} parent=1 // pred_check_branch
      %73 = sbr.rel (0) target = $region49
    $region48: #{discriminator_forward.1} parent=1 // pred_region
      %74 = dma.done [#allocation6], 16384
    $region49: #{discriminator_forward.1} parent=1 // pred_fallthru
      _
    %v75 = vld [vmem:[%s0] sm:$0xff]
    %v76 = vld [vmem:[%s0 + $0x8] sm:$0xff]
    %v77 = vld [vmem:[%s0 + $0x10] sm:$0xff]
    %v78 = vld [vmem:[%s0 + $0x18] sm:$0xff]
    %v79 = vpack.c.bf16 %v77, %v75
    %v80 = vpack.c.bf16 %v78, %v76
    %v81 = vld [vmem:[#allocation3] sm:$0xff]
    %v82 = vld [vmem:[#allocation3 + $0x8] sm:$0xff]
    %v83 = vld [vmem:[#allocation3 + $0x10] sm:$0xff]
    %v84 = vld [vmem:[#allocation3 + $0x18] sm:$0xff]
    %v85 = vld [vmem:[#allocation3 + $0x20] sm:$0xff]
    %v86 = vld [vmem:[#allocation3 + $0x28] sm:$0xff]
    %v87 = vld [vmem:[#allocation3 + $0x30] sm:$0xff]
    %v88 = vld [vmem:[#allocation3 + $0x38] sm:$0xff]
    %v89 = vld [vmem:[#allocation3 + $0x40] sm:$0xff]
    %v90 = vld [vmem:[#allocation3 + $0x48] sm:$0xff]
    %v91 = vld [vmem:[#allocation3 + $0x50] sm:$0xff]
    %v92 = vld [vmem:[#allocation3 + $0x58] sm:$0xff]
    %v93 = vld [vmem:[#allocation3 + $0x60] sm:$0xff]
    %v94 = vld [vmem:[#allocation3 + $0x68] sm:$0xff]
    %v95 = vld [vmem:[#allocation3 + $0x70] sm:$0xff]
    %v96 = vld [vmem:[#allocation3 + $0x78] sm:$0xff]
    %v97 = vld [vmem:[#allocation3 + $0x80] sm:$0xff]
    %v98 = vld [vmem:[#allocation3 + $0x88] sm:$0xff]
    %v99 = vld [vmem:[#allocation3 + $0x90] sm:$0xff]
    %v100 = vld [vmem:[#allocation3 + $0x98] sm:$0xff]
    %v101 = vld [vmem:[#allocation3 + $0xa0] sm:$0xff]
    %v102 = vld [vmem:[#allocation3 + $0xa8] sm:$0xff]
    %v103 = vld [vmem:[#allocation3 + $0xb0] sm:$0xff]
    %v104 = vld [vmem:[#allocation3 + $0xb8] sm:$0xff]
    %v105 = vld [vmem:[#allocation3 + $0xc0] sm:$0xff]
    %v106 = vld [vmem:[#allocation3 + $0xc8] sm:$0xff]
    %v107 = vld [vmem:[#allocation3 + $0xd0] sm:$0xff]
    %v108 = vld [vmem:[#allocation3 + $0xd8] sm:$0xff]
    %v109 = vld [vmem:[#allocation3 + $0xe0] sm:$0xff]
    %v110 = vld [vmem:[#allocation3 + $0xe8] sm:$0xff]
    %v111 = vld [vmem:[#allocation3 + $0xf0] sm:$0xff]
    %v112 = vld [vmem:[#allocation3 + $0xf8] sm:$0xff]
    %v113 = vld [vmem:[#allocation3 + $0x100] sm:$0xff]
    %v114 = vld [vmem:[#allocation3 + $0x108] sm:$0xff]
    %v115 = vld [vmem:[#allocation3 + $0x110] sm:$0xff]
    %v116 = vld [vmem:[#allocation3 + $0x118] sm:$0xff]
    %v117 = vld [vmem:[#allocation3 + $0x120] sm:$0xff]
    %v118 = vld [vmem:[#allocation3 + $0x128] sm:$0xff]
    %v119 = vld [vmem:[#allocation3 + $0x130] sm:$0xff]
    %v120 = vld [vmem:[#allocation3 + $0x138] sm:$0xff]
    %v121 = vld [vmem:[#allocation3 + $0x140] sm:$0xff]
    %v122 = vld [vmem:[#allocation3 + $0x148] sm:$0xff]
    %v123 = vld [vmem:[#allocation3 + $0x150] sm:$0xff]
    %v124 = vld [vmem:[#allocation3 + $0x158] sm:$0xff]
    %v125 = vld [vmem:[#allocation3 + $0x160] sm:$0xff]
    %v126 = vld [vmem:[#allocation3 + $0x168] sm:$0xff]
    %v127 = vld [vmem:[#allocation3 + $0x170] sm:$0xff]
    %v128 = vld [vmem:[#allocation3 + $0x178] sm:$0xff]
    %v129 = vld [vmem:[#allocation3 + $0x180] sm:$0xff]
    %v130 = vld [vmem:[#allocation3 + $0x188] sm:$0xff]
    %v131 = vld [vmem:[#allocation3 + $0x190] sm:$0xff]
    %v132 = vld [vmem:[#allocation3 + $0x198] sm:$0xff]
    %v133 = vld [vmem:[#allocation3 + $0x1a0] sm:$0xff]
    %v134 = vld [vmem:[#allocation3 + $0x1a8] sm:$0xff]
    %v135 = vld [vmem:[#allocation3 + $0x1b0] sm:$0xff]
    %v136 = vld [vmem:[#allocation3 + $0x1b8] sm:$0xff]
    %v137 = vld [vmem:[#allocation3 + $0x1c0] sm:$0xff]
    %v138 = vld [vmem:[#allocation3 + $0x1c8] sm:$0xff]
    %v139 = vld [vmem:[#allocation3 + $0x1d0] sm:$0xff]
    %v140 = vld [vmem:[#allocation3 + $0x1d8] sm:$0xff]
    %v141 = vld [vmem:[#allocation3 + $0x1e0] sm:$0xff]
    %v142 = vld [vmem:[#allocation3 + $0x1e8] sm:$0xff]
    %v143 = vld [vmem:[#allocation3 + $0x1f0] sm:$0xff]
    %v144 = vld [vmem:[#allocation3 + $0x1f8] sm:$0xff]
    %v145 = vld [vmem:[%s1] sm:$0xff]
    %v146 = vld [vmem:[%s1 + $0x8] sm:$0xff]
    %v147 = vld [vmem:[%s1 + $0x10] sm:$0xff]
    %v148 = vld [vmem:[%s1 + $0x18] sm:$0xff]
    %v149 = vld [vmem:[%s1 + $0x20] sm:$0xff]
    %v150 = vld [vmem:[%s1 + $0x28] sm:$0xff]
    %v151 = vld [vmem:[%s1 + $0x30] sm:$0xff]
    %v152 = vld [vmem:[%s1 + $0x38] sm:$0xff]
    %v217 = vunpack.c.l.b16 %v81
    %v218 = vunpack.c.h.b16 %v81
    %v219 = vunpack.c.l.b16 %v82
    %v220 = vunpack.c.h.b16 %v82
    %v221 = vunpack.c.l.b16 %v83
    %v222 = vunpack.c.h.b16 %v83
    %v223 = vunpack.c.l.b16 %v84
    %v224 = vunpack.c.h.b16 %v84
    %v225 = vunpack.c.l.b16 %v85
    %v226 = vunpack.c.h.b16 %v85
    %v227 = vunpack.c.l.b16 %v86
    %v228 = vunpack.c.h.b16 %v86
    %v229 = vunpack.c.l.b16 %v87
    %v230 = vunpack.c.h.b16 %v87
    %v231 = vunpack.c.l.b16 %v88
    %v232 = vunpack.c.h.b16 %v88
    %v233 = vunpack.c.l.b16 %v89
    %v234 = vunpack.c.h.b16 %v89
    %v235 = vunpack.c.l.b16 %v90
    %v236 = vunpack.c.h.b16 %v90
    %v237 = vunpack.c.l.b16 %v91
    %v238 = vunpack.c.h.b16 %v91
    %v239 = vunpack.c.l.b16 %v92
    %v240 = vunpack.c.h.b16 %v92
    %v241 = vunpack.c.l.b16 %v93
    %v242 = vunpack.c.h.b16 %v93
    %v243 = vunpack.c.l.b16 %v94
    %v244 = vunpack.c.h.b16 %v94
    %v245 = vunpack.c.l.b16 %v95
    %v246 = vunpack.c.h.b16 %v95
    %v247 = vunpack.c.l.b16 %v96
    %v248 = vunpack.c.h.b16 %v96
    %v249 = vunpack.c.l.b16 %v97
    %v250 = vunpack.c.h.b16 %v97
    %v251 = vunpack.c.l.b16 %v98
    %v252 = vunpack.c.h.b16 %v98
    %v253 = vunpack.c.l.b16 %v99
    %v254 = vunpack.c.h.b16 %v99
    %v255 = vunpack.c.l.b16 %v100
    %v256 = vunpack.c.h.b16 %v100
    %v257 = vunpack.c.l.b16 %v101
    %v258 = vunpack.c.h.b16 %v101
    %v259 = vunpack.c.l.b16 %v102
    %v260 = vunpack.c.h.b16 %v102
    %v261 = vunpack.c.l.b16 %v103
    %v262 = vunpack.c.h.b16 %v103
    %v263 = vunpack.c.l.b16 %v104
    %v264 = vunpack.c.h.b16 %v104
    %v265 = vunpack.c.l.b16 %v105
    %v266 = vunpack.c.h.b16 %v105
    %v267 = vunpack.c.l.b16 %v106
    %v268 = vunpack.c.h.b16 %v106
    %v269 = vunpack.c.l.b16 %v107
    %v270 = vunpack.c.h.b16 %v107
    %v271 = vunpack.c.l.b16 %v108
    %v272 = vunpack.c.h.b16 %v108
    %v273 = vunpack.c.l.b16 %v109
    %v274 = vunpack.c.h.b16 %v109
    %v275 = vunpack.c.l.b16 %v110
    %v276 = vunpack.c.h.b16 %v110
    %v277 = vunpack.c.l.b16 %v111
    %v278 = vunpack.c.h.b16 %v111
    %v279 = vunpack.c.l.b16 %v112
    %v280 = vunpack.c.h.b16 %v112
    %v281 = vunpack.c.l.b16 %v113
    %v282 = vunpack.c.h.b16 %v113
    %v283 = vunpack.c.l.b16 %v114
    %v284 = vunpack.c.h.b16 %v114
    %v285 = vunpack.c.l.b16 %v115
    %v286 = vunpack.c.h.b16 %v115
    %v287 = vunpack.c.l.b16 %v116
    %v288 = vunpack.c.h.b16 %v116
    %v289 = vunpack.c.l.b16 %v117
    %v290 = vunpack.c.h.b16 %v117
    %v291 = vunpack.c.l.b16 %v118
    %v292 = vunpack.c.h.b16 %v118
    %v293 = vunpack.c.l.b16 %v119
    %v294 = vunpack.c.h.b16 %v119
    %v295 = vunpack.c.l.b16 %v120
    %v296 = vunpack.c.h.b16 %v120
    %v297 = vunpack.c.l.b16 %v121
    %v298 = vunpack.c.h.b16 %v121
    %v299 = vunpack.c.l.b16 %v122
    %v300 = vunpack.c.h.b16 %v122
    %v301 = vunpack.c.l.b16 %v123
    %v302 = vunpack.c.h.b16 %v123
    %v303 = vunpack.c.l.b16 %v124
    %v304 = vunpack.c.h.b16 %v124
    %v305 = vunpack.c.l.b16 %v125
    %v306 = vunpack.c.h.b16 %v125
    %v307 = vunpack.c.l.b16 %v126
    %v308 = vunpack.c.h.b16 %v126
    %v309 = vunpack.c.l.b16 %v127
    %v310 = vunpack.c.h.b16 %v127
    %v311 = vunpack.c.l.b16 %v128
    %v312 = vunpack.c.h.b16 %v128
    %v313 = vunpack.c.l.b16 %v129
    %v314 = vunpack.c.h.b16 %v129
    %v315 = vunpack.c.l.b16 %v130
    %v316 = vunpack.c.h.b16 %v130
    %v317 = vunpack.c.l.b16 %v131
    %v318 = vunpack.c.h.b16 %v131
    %v319 = vunpack.c.l.b16 %v132
    %v320 = vunpack.c.h.b16 %v132
    %v321 = vunpack.c.l.b16 %v133
    %v322 = vunpack.c.h.b16 %v133
    %v323 = vunpack.c.l.b16 %v134
    %v324 = vunpack.c.h.b16 %v134
    %v325 = vunpack.c.l.b16 %v135
    %v326 = vunpack.c.h.b16 %v135
    %v327 = vunpack.c.l.b16 %v136
    %v328 = vunpack.c.h.b16 %v136
    %v329 = vunpack.c.l.b16 %v137
    %v330 = vunpack.c.h.b16 %v137
    %v331 = vunpack.c.l.b16 %v138
    %v332 = vunpack.c.h.b16 %v138
    %v333 = vunpack.c.l.b16 %v139
    %v334 = vunpack.c.h.b16 %v139
    %v335 = vunpack.c.l.b16 %v140
    %v336 = vunpack.c.h.b16 %v140
    %v337 = vunpack.c.l.b16 %v141
    %v338 = vunpack.c.h.b16 %v141
    %v339 = vunpack.c.l.b16 %v142
    %v340 = vunpack.c.h.b16 %v142
    %v341 = vunpack.c.l.b16 %v143
    %v342 = vunpack.c.h.b16 %v143
    %v343 = vunpack.c.l.b16 %v144
    %v344 = vunpack.c.h.b16 %v144
    %v345 = vpack.c.b16 %v221, %v217
    %v346 = vpack.c.b16 %v222, %v218
    %v347 = vpack.c.b16 %v223, %v219
    %v348 = vpack.c.b16 %v224, %v220
    %v349 = vpack.c.b16 %v229, %v225
    %v350 = vpack.c.b16 %v230, %v226
    %v351 = vpack.c.b16 %v231, %v227
    %v352 = vpack.c.b16 %v232, %v228
    %v353 = vpack.c.b16 %v237, %v233
    %v354 = vpack.c.b16 %v238, %v234
    %v355 = vpack.c.b16 %v239, %v235
    %v356 = vpack.c.b16 %v240, %v236
    %v357 = vpack.c.b16 %v245, %v241
    %v358 = vpack.c.b16 %v246, %v242
    %v359 = vpack.c.b16 %v247, %v243
    %v360 = vpack.c.b16 %v248, %v244
    %v361 = vpack.c.b16 %v253, %v249
    %v362 = vpack.c.b16 %v254, %v250
    %v363 = vpack.c.b16 %v255, %v251
    %v364 = vpack.c.b16 %v256, %v252
    %v365 = vpack.c.b16 %v261, %v257
    %v366 = vpack.c.b16 %v262, %v258
    %v367 = vpack.c.b16 %v263, %v259
    %v368 = vpack.c.b16 %v264, %v260
    %v369 = vpack.c.b16 %v269, %v265
    %v370 = vpack.c.b16 %v270, %v266
    %v371 = vpack.c.b16 %v271, %v267
    %v372 = vpack.c.b16 %v272, %v268
    %v373 = vpack.c.b16 %v277, %v273
    %v374 = vpack.c.b16 %v278, %v274
    %v375 = vpack.c.b16 %v279, %v275
    %v376 = vpack.c.b16 %v280, %v276
    %v377 = vpack.c.b16 %v285, %v281
    %v378 = vpack.c.b16 %v286, %v282
    %v379 = vpack.c.b16 %v287, %v283
    %v380 = vpack.c.b16 %v288, %v284
    %v381 = vpack.c.b16 %v293, %v289
    %v382 = vpack.c.b16 %v294, %v290
    %v383 = vpack.c.b16 %v295, %v291
    %v384 = vpack.c.b16 %v296, %v292
    %v385 = vpack.c.b16 %v301, %v297
    %v386 = vpack.c.b16 %v302, %v298
    %v387 = vpack.c.b16 %v303, %v299
    %v388 = vpack.c.b16 %v304, %v300
    %v389 = vpack.c.b16 %v309, %v305
    %v390 = vpack.c.b16 %v310, %v306
    %v391 = vpack.c.b16 %v311, %v307
    %v392 = vpack.c.b16 %v312, %v308
    %v393 = vpack.c.b16 %v317, %v313
    %v394 = vpack.c.b16 %v318, %v314
    %v395 = vpack.c.b16 %v319, %v315
    %v396 = vpack.c.b16 %v320, %v316
    %v397 = vpack.c.b16 %v325, %v321
    %v398 = vpack.c.b16 %v326, %v322
    %v399 = vpack.c.b16 %v327, %v323
    %v400 = vpack.c.b16 %v328, %v324
    %v401 = vpack.c.b16 %v333, %v329
    %v402 = vpack.c.b16 %v334, %v330
    %v403 = vpack.c.b16 %v335, %v331
    %v404 = vpack.c.b16 %v336, %v332
    %v405 = vpack.c.b16 %v341, %v337
    %v406 = vpack.c.b16 %v342, %v338
    %v407 = vpack.c.b16 %v343, %v339
    %v408 = vpack.c.b16 %v344, %v340
    %473 = vmatprep.subr.bf16.mxu0 %v346
    %474 = vmatpush1.bf16.msra.mxu0 %v345
    %475 = vmatprep.subr.bf16.mxu0 %v350
    %476 = vmatpush1.bf16.msra.mxu0 %v349
    %477 = vmatprep.subr.bf16.mxu0 %v354
    %478 = vmatpush1.bf16.msra.mxu0 %v353
    %479 = vmatprep.subr.bf16.mxu0 %v358
    %480 = vmatpush1.bf16.msra.mxu0 %v357
    %481 = vmatprep.subr.bf16.mxu0 %v362
    %482 = vmatpush1.bf16.msra.mxu0 %v361
    %483 = vmatprep.subr.bf16.mxu0 %v366
    %484 = vmatpush1.bf16.msra.mxu0 %v365
    %485 = vmatprep.subr.bf16.mxu0 %v370
    %486 = vmatpush1.bf16.msra.mxu0 %v369
    %487 = vmatprep.subr.bf16.mxu0 %v374
    %488 = vmatpush1.bf16.msra.mxu0 %v373
    %489 = vmatprep.subr.bf16.mxu0 %v378
    %490 = vmatpush1.bf16.msra.mxu0 %v377
    %491 = vmatprep.subr.bf16.mxu0 %v382
    %492 = vmatpush1.bf16.msra.mxu0 %v381
    %493 = vmatprep.subr.bf16.mxu0 %v386
    %494 = vmatpush1.bf16.msra.mxu0 %v385
    %495 = vmatprep.subr.bf16.mxu0 %v390
    %496 = vmatpush1.bf16.msra.mxu0 %v389
    %497 = vmatprep.subr.bf16.mxu0 %v394
    %498 = vmatpush1.bf16.msra.mxu0 %v393
    %499 = vmatprep.subr.bf16.mxu0 %v398
    %500 = vmatpush1.bf16.msra.mxu0 %v397
    %501 = vmatprep.subr.bf16.mxu0 %v402
    %502 = vmatpush1.bf16.msra.mxu0 %v401
    %503 = vmatprep.subr.bf16.mxu0 %v406
    %504 = vmatpush1.bf16.msra.mxu0 %v405
    %505 = vmatprep.mubr.bf16.mxu0 %v80
    %506 = vmatmul.mubr.bf16.gmra.mrb[0].mxu0 %v79
    %v507 = vpop.f32.mrb[0].mxu0
    %v508 = vadd.f32 %v145, %v507
    %v509 = vpop.f32.mrb[0].mxu0
    %v510 = vadd.f32 %v146, %v509
    %v511 = vpop.f32.mrb[0].mxu0
    %v512 = vadd.f32 %v149, %v511
    %v513 = vpop.f32.mrb[0].mxu0
    %v514 = vadd.f32 %v150, %v513
    %515 = vdwg.mxu0
    %516 = vmatprep.subr.bf16.mxu0 %v348
    %517 = vmatpush1.bf16.msra.mxu0 %v347
    %518 = vmatprep.subr.bf16.mxu0 %v352
    %519 = vmatpush1.bf16.msra.mxu0 %v351
    %520 = vmatprep.subr.bf16.mxu0 %v356
    %521 = vmatpush1.bf16.msra.mxu0 %v355
    %522 = vmatprep.subr.bf16.mxu0 %v360
    %523 = vmatpush1.bf16.msra.mxu0 %v359
    %524 = vmatprep.subr.bf16.mxu0 %v364
    %525 = vmatpush1.bf16.msra.mxu0 %v363
    %526 = vmatprep.subr.bf16.mxu0 %v368
    %527 = vmatpush1.bf16.msra.mxu0 %v367
    %528 = vmatprep.subr.bf16.mxu0 %v372
    %529 = vmatpush1.bf16.msra.mxu0 %v371
    %530 = vmatprep.subr.bf16.mxu0 %v376
    %531 = vmatpush1.bf16.msra.mxu0 %v375
    %532 = vmatprep.subr.bf16.mxu0 %v380
    %533 = vmatpush1.bf16.msra.mxu0 %v379
    %534 = vmatprep.subr.bf16.mxu0 %v384
    %535 = vmatpush1.bf16.msra.mxu0 %v383
    %536 = vmatprep.subr.bf16.mxu0 %v388
    %537 = vmatpush1.bf16.msra.mxu0 %v387
    %538 = vmatprep.subr.bf16.mxu0 %v392
    %539 = vmatpush1.bf16.msra.mxu0 %v391
    %540 = vmatprep.subr.bf16.mxu0 %v396
    %541 = vmatpush1.bf16.msra.mxu0 %v395
    %542 = vmatprep.subr.bf16.mxu0 %v400
    %543 = vmatpush1.bf16.msra.mxu0 %v399
    %544 = vmatprep.subr.bf16.mxu0 %v404
    %545 = vmatpush1.bf16.msra.mxu0 %v403
    %546 = vmatprep.subr.bf16.mxu0 %v408
    %547 = vmatpush1.bf16.msra.mxu0 %v407
    %548 = vmatprep.mubr.bf16.mxu0 %v80
    %549 = vmatmul.mubr.bf16.gmra.mrb[0].mxu0 %v79
    %v550 = vpop.f32.mrb[0].mxu0
    %v551 = vadd.f32 %v147, %v550
    %v552 = vpop.f32.mrb[0].mxu0
    %v553 = vadd.f32 %v148, %v552
    %v554 = vpop.f32.mrb[0].mxu0
    %v555 = vadd.f32 %v151, %v554
    %v556 = vpop.f32.mrb[0].mxu0
    %v557 = vadd.f32 %v152, %v556
    %558 = vdwg.mxu0
    %vm559 = vcmp.ge.f32.partialorder %v508, 0.0
    %vm560 = vcmp.ge.f32.partialorder %v510, 0.0
    %vm561 = vcmp.ge.f32.partialorder %v551, 0.0
    %vm562 = vcmp.ge.f32.partialorder %v553, 0.0
    %vm563 = vcmp.ge.f32.partialorder %v512, 0.0
    %vm564 = vcmp.ge.f32.partialorder %v514, 0.0
    %vm565 = vcmp.ge.f32.partialorder %v555, 0.0
    %vm566 = vcmp.ge.f32.partialorder %v557, 0.0
    %v567 = vmul.f32 %v508, 0.2
    %v568 = vmul.f32 %v510, 0.2
    %v569 = vmul.f32 %v551, 0.2
    %v570 = vmul.f32 %v553, 0.2
    %v571 = vmul.f32 %v512, 0.2
    %v572 = vmul.f32 %v514, 0.2
    %v573 = vmul.f32 %v555, 0.2
    %v574 = vmul.f32 %v557, 0.2
    %v575 = vsel %vm559, %v508, %v567
    %v576 = vsel %vm560, %v510, %v568
    %v577 = vsel %vm561, %v551, %v569
    %v578 = vsel %vm562, %v553, %v570
    %v579 = vsel %vm563, %v512, %v571
    %v580 = vsel %vm564, %v514, %v572
    %v581 = vsel %vm565, %v555, %v573
    %v582 = vsel %vm566, %v557, %v574
    %v583 = vpack.c.bf16 %v579, %v575
    %v584 = vpack.c.bf16 %v580, %v576
    %v585 = vpack.c.bf16 %v581, %v577
    %v586 = vpack.c.bf16 %v582, %v578
    %v587 = vld [vmem:[#allocation5] sm:$0xff]
    %v588 = vld [vmem:[#allocation5 + $0x8] sm:$0xff]
    %v589 = vld [vmem:[#allocation5 + $0x10] sm:$0xff]
    %v590 = vld [vmem:[#allocation5 + $0x18] sm:$0xff]
    %v591 = vld [vmem:[#allocation5 + $0x20] sm:$0xff]
    %v592 = vld [vmem:[#allocation5 + $0x28] sm:$0xff]
    %v593 = vld [vmem:[#allocation5 + $0x30] sm:$0xff]
    %v594 = vld [vmem:[#allocation5 + $0x38] sm:$0xff]
    %v595 = vld [vmem:[#allocation5 + $0x40] sm:$0xff]
    %v596 = vld [vmem:[#allocation5 + $0x48] sm:$0xff]
    %v597 = vld [vmem:[#allocation5 + $0x50] sm:$0xff]
    %v598 = vld [vmem:[#allocation5 + $0x58] sm:$0xff]
    %v599 = vld [vmem:[#allocation5 + $0x60] sm:$0xff]
    %v600 = vld [vmem:[#allocation5 + $0x68] sm:$0xff]
    %v601 = vld [vmem:[#allocation5 + $0x70] sm:$0xff]
    %v602 = vld [vmem:[#allocation5 + $0x78] sm:$0xff]
    %v603 = vld [vmem:[#allocation5 + $0x80] sm:$0xff]
    %v604 = vld [vmem:[#allocation5 + $0x88] sm:$0xff]
    %v605 = vld [vmem:[#allocation5 + $0x90] sm:$0xff]
    %v606 = vld [vmem:[#allocation5 + $0x98] sm:$0xff]
    %v607 = vld [vmem:[#allocation5 + $0xa0] sm:$0xff]
    %v608 = vld [vmem:[#allocation5 + $0xa8] sm:$0xff]
    %v609 = vld [vmem:[#allocation5 + $0xb0] sm:$0xff]
    %v610 = vld [vmem:[#allocation5 + $0xb8] sm:$0xff]
    %v611 = vld [vmem:[#allocation5 + $0xc0] sm:$0xff]
    %v612 = vld [vmem:[#allocation5 + $0xc8] sm:$0xff]
    %v613 = vld [vmem:[#allocation5 + $0xd0] sm:$0xff]
    %v614 = vld [vmem:[#allocation5 + $0xd8] sm:$0xff]
    %v615 = vld [vmem:[#allocation5 + $0xe0] sm:$0xff]
    %v616 = vld [vmem:[#allocation5 + $0xe8] sm:$0xff]
    %v617 = vld [vmem:[#allocation5 + $0xf0] sm:$0xff]
    %v618 = vld [vmem:[#allocation5 + $0xf8] sm:$0xff]
    %v619 = vld [vmem:[#allocation5 + $0x100] sm:$0xff]
    %v620 = vld [vmem:[#allocation5 + $0x108] sm:$0xff]
    %v621 = vld [vmem:[#allocation5 + $0x110] sm:$0xff]
    %v622 = vld [vmem:[#allocation5 + $0x118] sm:$0xff]
    %v623 = vld [vmem:[#allocation5 + $0x120] sm:$0xff]
    %v624 = vld [vmem:[#allocation5 + $0x128] sm:$0xff]
    %v625 = vld [vmem:[#allocation5 + $0x130] sm:$0xff]
    %v626 = vld [vmem:[#allocation5 + $0x138] sm:$0xff]
    %v627 = vld [vmem:[#allocation5 + $0x140] sm:$0xff]
    %v628 = vld [vmem:[#allocation5 + $0x148] sm:$0xff]
    %v629 = vld [vmem:[#allocation5 + $0x150] sm:$0xff]
    %v630 = vld [vmem:[#allocation5 + $0x158] sm:$0xff]
    %v631 = vld [vmem:[#allocation5 + $0x160] sm:$0xff]
    %v632 = vld [vmem:[#allocation5 + $0x168] sm:$0xff]
    %v633 = vld [vmem:[#allocation5 + $0x170] sm:$0xff]
    %v634 = vld [vmem:[#allocation5 + $0x178] sm:$0xff]
    %v635 = vld [vmem:[#allocation5 + $0x180] sm:$0xff]
    %v636 = vld [vmem:[#allocation5 + $0x188] sm:$0xff]
    %v637 = vld [vmem:[#allocation5 + $0x190] sm:$0xff]
    %v638 = vld [vmem:[#allocation5 + $0x198] sm:$0xff]
    %v639 = vld [vmem:[#allocation5 + $0x1a0] sm:$0xff]
    %v640 = vld [vmem:[#allocation5 + $0x1a8] sm:$0xff]
    %v641 = vld [vmem:[#allocation5 + $0x1b0] sm:$0xff]
    %v642 = vld [vmem:[#allocation5 + $0x1b8] sm:$0xff]
    %v643 = vld [vmem:[#allocation5 + $0x1c0] sm:$0xff]
    %v644 = vld [vmem:[#allocation5 + $0x1c8] sm:$0xff]
    %v645 = vld [vmem:[#allocation5 + $0x1d0] sm:$0xff]
    %v646 = vld [vmem:[#allocation5 + $0x1d8] sm:$0xff]
    %v647 = vld [vmem:[#allocation5 + $0x1e0] sm:$0xff]
    %v648 = vld [vmem:[#allocation5 + $0x1e8] sm:$0xff]
    %v649 = vld [vmem:[#allocation5 + $0x1f0] sm:$0xff]
    %v650 = vld [vmem:[#allocation5 + $0x1f8] sm:$0xff]
    %v651 = vld [vmem:[#allocation5 + $0x200] sm:$0xff]
    %v652 = vld [vmem:[#allocation5 + $0x208] sm:$0xff]
    %v653 = vld [vmem:[#allocation5 + $0x210] sm:$0xff]
    %v654 = vld [vmem:[#allocation5 + $0x218] sm:$0xff]
    %v655 = vld [vmem:[#allocation5 + $0x220] sm:$0xff]
    %v656 = vld [vmem:[#allocation5 + $0x228] sm:$0xff]
    %v657 = vld [vmem:[#allocation5 + $0x230] sm:$0xff]
    %v658 = vld [vmem:[#allocation5 + $0x238] sm:$0xff]
    %v659 = vld [vmem:[#allocation5 + $0x240] sm:$0xff]
    %v660 = vld [vmem:[#allocation5 + $0x248] sm:$0xff]
    %v661 = vld [vmem:[#allocation5 + $0x250] sm:$0xff]
    %v662 = vld [vmem:[#allocation5 + $0x258] sm:$0xff]
    %v663 = vld [vmem:[#allocation5 + $0x260] sm:$0xff]
    %v664 = vld [vmem:[#allocation5 + $0x268] sm:$0xff]
    %v665 = vld [vmem:[#allocation5 + $0x270] sm:$0xff]
    %v666 = vld [vmem:[#allocation5 + $0x278] sm:$0xff]
    %v667 = vld [vmem:[#allocation5 + $0x280] sm:$0xff]
    %v668 = vld [vmem:[#allocation5 + $0x288] sm:$0xff]
    %v669 = vld [vmem:[#allocation5 + $0x290] sm:$0xff]
    %v670 = vld [vmem:[#allocation5 + $0x298] sm:$0xff]
    %v671 = vld [vmem:[#allocation5 + $0x2a0] sm:$0xff]
    %v672 = vld [vmem:[#allocation5 + $0x2a8] sm:$0xff]
    %v673 = vld [vmem:[#allocation5 + $0x2b0] sm:$0xff]
    %v674 = vld [vmem:[#allocation5 + $0x2b8] sm:$0xff]
    %v675 = vld [vmem:[#allocation5 + $0x2c0] sm:$0xff]
    %v676 = vld [vmem:[#allocation5 + $0x2c8] sm:$0xff]
    %v677 = vld [vmem:[#allocation5 + $0x2d0] sm:$0xff]
    %v678 = vld [vmem:[#allocation5 + $0x2d8] sm:$0xff]
    %v679 = vld [vmem:[#allocation5 + $0x2e0] sm:$0xff]
    %v680 = vld [vmem:[#allocation5 + $0x2e8] sm:$0xff]
    %v681 = vld [vmem:[#allocation5 + $0x2f0] sm:$0xff]
    %v682 = vld [vmem:[#allocation5 + $0x2f8] sm:$0xff]
    %v683 = vld [vmem:[#allocation5 + $0x300] sm:$0xff]
    %v684 = vld [vmem:[#allocation5 + $0x308] sm:$0xff]
    %v685 = vld [vmem:[#allocation5 + $0x310] sm:$0xff]
    %v686 = vld [vmem:[#allocation5 + $0x318] sm:$0xff]
    %v687 = vld [vmem:[#allocation5 + $0x320] sm:$0xff]
    %v688 = vld [vmem:[#allocation5 + $0x328] sm:$0xff]
    %v689 = vld [vmem:[#allocation5 + $0x330] sm:$0xff]
    %v690 = vld [vmem:[#allocation5 + $0x338] sm:$0xff]
    %v691 = vld [vmem:[#allocation5 + $0x340] sm:$0xff]
    %v692 = vld [vmem:[#allocation5 + $0x348] sm:$0xff]
    %v693 = vld [vmem:[#allocation5 + $0x350] sm:$0xff]
    %v694 = vld [vmem:[#allocation5 + $0x358] sm:$0xff]
    %v695 = vld [vmem:[#allocation5 + $0x360] sm:$0xff]
    %v696 = vld [vmem:[#allocation5 + $0x368] sm:$0xff]
    %v697 = vld [vmem:[#allocation5 + $0x370] sm:$0xff]
    %v698 = vld [vmem:[#allocation5 + $0x378] sm:$0xff]
    %v699 = vld [vmem:[#allocation5 + $0x380] sm:$0xff]
    %v700 = vld [vmem:[#allocation5 + $0x388] sm:$0xff]
    %v701 = vld [vmem:[#allocation5 + $0x390] sm:$0xff]
    %v702 = vld [vmem:[#allocation5 + $0x398] sm:$0xff]
    %v703 = vld [vmem:[#allocation5 + $0x3a0] sm:$0xff]
    %v704 = vld [vmem:[#allocation5 + $0x3a8] sm:$0xff]
    %v705 = vld [vmem:[#allocation5 + $0x3b0] sm:$0xff]
    %v706 = vld [vmem:[#allocation5 + $0x3b8] sm:$0xff]
    %v707 = vld [vmem:[#allocation5 + $0x3c0] sm:$0xff]
    %v708 = vld [vmem:[#allocation5 + $0x3c8] sm:$0xff]
    %v709 = vld [vmem:[#allocation5 + $0x3d0] sm:$0xff]
    %v710 = vld [vmem:[#allocation5 + $0x3d8] sm:$0xff]
    %v711 = vld [vmem:[#allocation5 + $0x3e0] sm:$0xff]
    %v712 = vld [vmem:[#allocation5 + $0x3e8] sm:$0xff]
    %v713 = vld [vmem:[#allocation5 + $0x3f0] sm:$0xff]
    %v714 = vld [vmem:[#allocation5 + $0x3f8] sm:$0xff]
    %v715 = vld [vmem:[%s4] sm:$0xf]
    %v717 = vlaneseq
    %v718 = vshrl.u32 %v717, 7
    %v719 = vsub.s32 0, %v718
    %v720 = vrot.slane %v715, %v719
    %v721 = vlaneseq
    %v722 = vshrl.u32 %v721, 7
    %v723 = vsub.s32 1, %v722
    %v724 = vrot.slane %v715, %v723
    %v725 = vlaneseq
    %v726 = vshrl.u32 %v725, 7
    %v727 = vsub.s32 2, %v726
    %v728 = vrot.slane %v715, %v727
    %v729 = vlaneseq
    %v730 = vshrl.u32 %v729, 7
    %v731 = vsub.s32 3, %v730
    %v732 = vrot.slane %v715, %v731
    %v865 = vunpack.c.l.b16 %v587
    %v866 = vunpack.c.h.b16 %v587
    %v867 = vunpack.c.l.b16 %v588
    %v868 = vunpack.c.h.b16 %v588
    %v869 = vunpack.c.l.b16 %v589
    %v870 = vunpack.c.h.b16 %v589
    %v871 = vunpack.c.l.b16 %v590
    %v872 = vunpack.c.h.b16 %v590
    %v873 = vunpack.c.l.b16 %v591
    %v874 = vunpack.c.h.b16 %v591
    %v875 = vunpack.c.l.b16 %v592
    %v876 = vunpack.c.h.b16 %v592
    %v877 = vunpack.c.l.b16 %v593
    %v878 = vunpack.c.h.b16 %v593
    %v879 = vunpack.c.l.b16 %v594
    %v880 = vunpack.c.h.b16 %v594
    %v881 = vunpack.c.l.b16 %v595
    %v882 = vunpack.c.h.b16 %v595
    %v883 = vunpack.c.l.b16 %v596
    %v884 = vunpack.c.h.b16 %v596
    %v885 = vunpack.c.l.b16 %v597
    %v886 = vunpack.c.h.b16 %v597
    %v887 = vunpack.c.l.b16 %v598
    %v888 = vunpack.c.h.b16 %v598
    %v889 = vunpack.c.l.b16 %v599
    %v890 = vunpack.c.h.b16 %v599
    %v891 = vunpack.c.l.b16 %v600
    %v892 = vunpack.c.h.b16 %v600
    %v893 = vunpack.c.l.b16 %v601
    %v894 = vunpack.c.h.b16 %v601
    %v895 = vunpack.c.l.b16 %v602
    %v896 = vunpack.c.h.b16 %v602
    %v897 = vunpack.c.l.b16 %v603
    %v898 = vunpack.c.h.b16 %v603
    %v899 = vunpack.c.l.b16 %v604
    %v900 = vunpack.c.h.b16 %v604
    %v901 = vunpack.c.l.b16 %v605
    %v902 = vunpack.c.h.b16 %v605
    %v903 = vunpack.c.l.b16 %v606
    %v904 = vunpack.c.h.b16 %v606
    %v905 = vunpack.c.l.b16 %v607
    %v906 = vunpack.c.h.b16 %v607
    %v907 = vunpack.c.l.b16 %v608
    %v908 = vunpack.c.h.b16 %v608
    %v909 = vunpack.c.l.b16 %v609
    %v910 = vunpack.c.h.b16 %v609
    %v911 = vunpack.c.l.b16 %v610
    %v912 = vunpack.c.h.b16 %v610
    %v913 = vunpack.c.l.b16 %v611
    %v914 = vunpack.c.h.b16 %v611
    %v915 = vunpack.c.l.b16 %v612
    %v916 = vunpack.c.h.b16 %v612
    %v917 = vunpack.c.l.b16 %v613
    %v918 = vunpack.c.h.b16 %v613
    %v919 = vunpack.c.l.b16 %v614
    %v920 = vunpack.c.h.b16 %v614
    %v921 = vunpack.c.l.b16 %v615
    %v922 = vunpack.c.h.b16 %v615
    %v923 = vunpack.c.l.b16 %v616
    %v924 = vunpack.c.h.b16 %v616
    %v925 = vunpack.c.l.b16 %v617
    %v926 = vunpack.c.h.b16 %v617
    %v927 = vunpack.c.l.b16 %v618
    %v928 = vunpack.c.h.b16 %v618
    %v929 = vunpack.c.l.b16 %v619
    %v930 = vunpack.c.h.b16 %v619
    %v931 = vunpack.c.l.b16 %v620
    %v932 = vunpack.c.h.b16 %v620
    %v933 = vunpack.c.l.b16 %v621
    %v934 = vunpack.c.h.b16 %v621
    %v935 = vunpack.c.l.b16 %v622
    %v936 = vunpack.c.h.b16 %v622
    %v937 = vunpack.c.l.b16 %v623
    %v938 = vunpack.c.h.b16 %v623
    %v939 = vunpack.c.l.b16 %v624
    %v940 = vunpack.c.h.b16 %v624
    %v941 = vunpack.c.l.b16 %v625
    %v942 = vunpack.c.h.b16 %v625
    %v943 = vunpack.c.l.b16 %v626
    %v944 = vunpack.c.h.b16 %v626
    %v945 = vunpack.c.l.b16 %v627
    %v946 = vunpack.c.h.b16 %v627
    %v947 = vunpack.c.l.b16 %v628
    %v948 = vunpack.c.h.b16 %v628
    %v949 = vunpack.c.l.b16 %v629
    %v950 = vunpack.c.h.b16 %v629
    %v951 = vunpack.c.l.b16 %v630
    %v952 = vunpack.c.h.b16 %v630
    %v953 = vunpack.c.l.b16 %v631
    %v954 = vunpack.c.h.b16 %v631
    %v955 = vunpack.c.l.b16 %v632
    %v956 = vunpack.c.h.b16 %v632
    %v957 = vunpack.c.l.b16 %v633
    %v958 = vunpack.c.h.b16 %v633
    %v959 = vunpack.c.l.b16 %v634
    %v960 = vunpack.c.h.b16 %v634
    %v961 = vunpack.c.l.b16 %v635
    %v962 = vunpack.c.h.b16 %v635
    %v963 = vunpack.c.l.b16 %v636
    %v964 = vunpack.c.h.b16 %v636
    %v965 = vunpack.c.l.b16 %v637
    %v966 = vunpack.c.h.b16 %v637
    %v967 = vunpack.c.l.b16 %v638
    %v968 = vunpack.c.h.b16 %v638
    %v969 = vunpack.c.l.b16 %v639
    %v970 = vunpack.c.h.b16 %v639
    %v971 = vunpack.c.l.b16 %v640
    %v972 = vunpack.c.h.b16 %v640
    %v973 = vunpack.c.l.b16 %v641
    %v974 = vunpack.c.h.b16 %v641
    %v975 = vunpack.c.l.b16 %v642
    %v976 = vunpack.c.h.b16 %v642
    %v977 = vunpack.c.l.b16 %v643
    %v978 = vunpack.c.h.b16 %v643
    %v979 = vunpack.c.l.b16 %v644
    %v980 = vunpack.c.h.b16 %v644
    %v981 = vunpack.c.l.b16 %v645
    %v982 = vunpack.c.h.b16 %v645
    %v983 = vunpack.c.l.b16 %v646
    %v984 = vunpack.c.h.b16 %v646
    %v985 = vunpack.c.l.b16 %v647
    %v986 = vunpack.c.h.b16 %v647
    %v987 = vunpack.c.l.b16 %v648
    %v988 = vunpack.c.h.b16 %v648
    %v989 = vunpack.c.l.b16 %v649
    %v990 = vunpack.c.h.b16 %v649
    %v991 = vunpack.c.l.b16 %v650
    %v992 = vunpack.c.h.b16 %v650
    %v993 = vunpack.c.l.b16 %v651
    %v994 = vunpack.c.h.b16 %v651
    %v995 = vunpack.c.l.b16 %v652
    %v996 = vunpack.c.h.b16 %v652
    %v997 = vunpack.c.l.b16 %v653
    %v998 = vunpack.c.h.b16 %v653
    %v999 = vunpack.c.l.b16 %v654
    %v1000 = vunpack.c.h.b16 %v654
    %v1001 = vunpack.c.l.b16 %v655
    %v1002 = vunpack.c.h.b16 %v655
    %v1003 = vunpack.c.l.b16 %v656
    %v1004 = vunpack.c.h.b16 %v656
    %v1005 = vunpack.c.l.b16 %v657
    %v1006 = vunpack.c.h.b16 %v657
    %v1007 = vunpack.c.l.b16 %v658
    %v1008 = vunpack.c.h.b16 %v658
    %v1009 = vunpack.c.l.b16 %v659
    %v1010 = vunpack.c.h.b16 %v659
    %v1011 = vunpack.c.l.b16 %v660
    %v1012 = vunpack.c.h.b16 %v660
    %v1013 = vunpack.c.l.b16 %v661
    %v1014 = vunpack.c.h.b16 %v661
    %v1015 = vunpack.c.l.b16 %v662
    %v1016 = vunpack.c.h.b16 %v662
    %v1017 = vunpack.c.l.b16 %v663
    %v1018 = vunpack.c.h.b16 %v663
    %v1019 = vunpack.c.l.b16 %v664
    %v1020 = vunpack.c.h.b16 %v664
    %v1021 = vunpack.c.l.b16 %v665
    %v1022 = vunpack.c.h.b16 %v665
    %v1023 = vunpack.c.l.b16 %v666
    %v1024 = vunpack.c.h.b16 %v666
    %v1025 = vunpack.c.l.b16 %v667
    %v1026 = vunpack.c.h.b16 %v667
    %v1027 = vunpack.c.l.b16 %v668
    %v1028 = vunpack.c.h.b16 %v668
    %v1029 = vunpack.c.l.b16 %v669
    %v1030 = vunpack.c.h.b16 %v669
    %v1031 = vunpack.c.l.b16 %v670
    %v1032 = vunpack.c.h.b16 %v670
    %v1033 = vunpack.c.l.b16 %v671
    %v1034 = vunpack.c.h.b16 %v671
    %v1035 = vunpack.c.l.b16 %v672
    %v1036 = vunpack.c.h.b16 %v672
    %v1037 = vunpack.c.l.b16 %v673
    %v1038 = vunpack.c.h.b16 %v673
    %v1039 = vunpack.c.l.b16 %v674
    %v1040 = vunpack.c.h.b16 %v674
    %v1041 = vunpack.c.l.b16 %v675
    %v1042 = vunpack.c.h.b16 %v675
    %v1043 = vunpack.c.l.b16 %v676
    %v1044 = vunpack.c.h.b16 %v676
    %v1045 = vunpack.c.l.b16 %v677
    %v1046 = vunpack.c.h.b16 %v677
    %v1047 = vunpack.c.l.b16 %v678
    %v1048 = vunpack.c.h.b16 %v678
    %v1049 = vunpack.c.l.b16 %v679
    %v1050 = vunpack.c.h.b16 %v679
    %v1051 = vunpack.c.l.b16 %v680
    %v1052 = vunpack.c.h.b16 %v680
    %v1053 = vunpack.c.l.b16 %v681
    %v1054 = vunpack.c.h.b16 %v681
    %v1055 = vunpack.c.l.b16 %v682
    %v1056 = vunpack.c.h.b16 %v682
    %v1057 = vunpack.c.l.b16 %v683
    %v1058 = vunpack.c.h.b16 %v683
    %v1059 = vunpack.c.l.b16 %v684
    %v1060 = vunpack.c.h.b16 %v684
    %v1061 = vunpack.c.l.b16 %v685
    %v1062 = vunpack.c.h.b16 %v685
    %v1063 = vunpack.c.l.b16 %v686
    %v1064 = vunpack.c.h.b16 %v686
    %v1065 = vunpack.c.l.b16 %v687
    %v1066 = vunpack.c.h.b16 %v687
    %v1067 = vunpack.c.l.b16 %v688
    %v1068 = vunpack.c.h.b16 %v688
    %v1069 = vunpack.c.l.b16 %v689
    %v1070 = vunpack.c.h.b16 %v689
    %v1071 = vunpack.c.l.b16 %v690
    %v1072 = vunpack.c.h.b16 %v690
    %v1073 = vunpack.c.l.b16 %v691
    %v1074 = vunpack.c.h.b16 %v691
    %v1075 = vunpack.c.l.b16 %v692
    %v1076 = vunpack.c.h.b16 %v692
    %v1077 = vunpack.c.l.b16 %v693
    %v1078 = vunpack.c.h.b16 %v693
    %v1079 = vunpack.c.l.b16 %v694
    %v1080 = vunpack.c.h.b16 %v694
    %v1081 = vunpack.c.l.b16 %v695
    %v1082 = vunpack.c.h.b16 %v695
    %v1083 = vunpack.c.l.b16 %v696
    %v1084 = vunpack.c.h.b16 %v696
    %v1085 = vunpack.c.l.b16 %v697
    %v1086 = vunpack.c.h.b16 %v697
    %v1087 = vunpack.c.l.b16 %v698
    %v1088 = vunpack.c.h.b16 %v698
    %v1089 = vunpack.c.l.b16 %v699
    %v1090 = vunpack.c.h.b16 %v699
    %v1091 = vunpack.c.l.b16 %v700
    %v1092 = vunpack.c.h.b16 %v700
    %v1093 = vunpack.c.l.b16 %v701
    %v1094 = vunpack.c.h.b16 %v701
    %v1095 = vunpack.c.l.b16 %v702
    %v1096 = vunpack.c.h.b16 %v702
    %v1097 = vunpack.c.l.b16 %v703
    %v1098 = vunpack.c.h.b16 %v703
    %v1099 = vunpack.c.l.b16 %v704
    %v1100 = vunpack.c.h.b16 %v704
    %v1101 = vunpack.c.l.b16 %v705
    %v1102 = vunpack.c.h.b16 %v705
    %v1103 = vunpack.c.l.b16 %v706
    %v1104 = vunpack.c.h.b16 %v706
    %v1105 = vunpack.c.l.b16 %v707
    %v1106 = vunpack.c.h.b16 %v707
    %v1107 = vunpack.c.l.b16 %v708
    %v1108 = vunpack.c.h.b16 %v708
    %v1109 = vunpack.c.l.b16 %v709
    %v1110 = vunpack.c.h.b16 %v709
    %v1111 = vunpack.c.l.b16 %v710
    %v1112 = vunpack.c.h.b16 %v710
    %v1113 = vunpack.c.l.b16 %v711
    %v1114 = vunpack.c.h.b16 %v711
    %v1115 = vunpack.c.l.b16 %v712
    %v1116 = vunpack.c.h.b16 %v712
    %v1117 = vunpack.c.l.b16 %v713
    %v1118 = vunpack.c.h.b16 %v713
    %v1119 = vunpack.c.l.b16 %v714
    %v1120 = vunpack.c.h.b16 %v714
    %v1121 = vpack.c.b16 %v869, %v865
    %v1122 = vpack.c.b16 %v870, %v866
    %v1123 = vpack.c.b16 %v871, %v867
    %v1124 = vpack.c.b16 %v872, %v868
    %v1125 = vpack.c.b16 %v877, %v873
    %v1126 = vpack.c.b16 %v878, %v874
    %v1127 = vpack.c.b16 %v879, %v875
    %v1128 = vpack.c.b16 %v880, %v876
    %v1129 = vpack.c.b16 %v885, %v881
    %v1130 = vpack.c.b16 %v886, %v882
    %v1131 = vpack.c.b16 %v887, %v883
    %v1132 = vpack.c.b16 %v888, %v884
    %v1133 = vpack.c.b16 %v893, %v889
    %v1134 = vpack.c.b16 %v894, %v890
    %v1135 = vpack.c.b16 %v895, %v891
    %v1136 = vpack.c.b16 %v896, %v892
    %v1137 = vpack.c.b16 %v901, %v897
    %v1138 = vpack.c.b16 %v902, %v898
    %v1139 = vpack.c.b16 %v903, %v899
    %v1140 = vpack.c.b16 %v904, %v900
    %v1141 = vpack.c.b16 %v909, %v905
    %v1142 = vpack.c.b16 %v910, %v906
    %v1143 = vpack.c.b16 %v911, %v907
    %v1144 = vpack.c.b16 %v912, %v908
    %v1145 = vpack.c.b16 %v917, %v913
    %v1146 = vpack.c.b16 %v918, %v914
    %v1147 = vpack.c.b16 %v919, %v915
    %v1148 = vpack.c.b16 %v920, %v916
    %v1149 = vpack.c.b16 %v925, %v921
    %v1150 = vpack.c.b16 %v926, %v922
    %v1151 = vpack.c.b16 %v927, %v923
    %v1152 = vpack.c.b16 %v928, %v924
    %v1153 = vpack.c.b16 %v933, %v929
    %v1154 = vpack.c.b16 %v934, %v930
    %v1155 = vpack.c.b16 %v935, %v931
    %v1156 = vpack.c.b16 %v936, %v932
    %v1157 = vpack.c.b16 %v941, %v937
    %v1158 = vpack.c.b16 %v942, %v938
    %v1159 = vpack.c.b16 %v943, %v939
    %v1160 = vpack.c.b16 %v944, %v940
    %v1161 = vpack.c.b16 %v949, %v945
    %v1162 = vpack.c.b16 %v950, %v946
    %v1163 = vpack.c.b16 %v951, %v947
    %v1164 = vpack.c.b16 %v952, %v948
    %v1165 = vpack.c.b16 %v957, %v953
    %v1166 = vpack.c.b16 %v958, %v954
    %v1167 = vpack.c.b16 %v959, %v955
    %v1168 = vpack.c.b16 %v960, %v956
    %v1169 = vpack.c.b16 %v965, %v961
    %v1170 = vpack.c.b16 %v966, %v962
    %v1171 = vpack.c.b16 %v967, %v963
    %v1172 = vpack.c.b16 %v968, %v964
    %v1173 = vpack.c.b16 %v973, %v969
    %v1174 = vpack.c.b16 %v974, %v970
    %v1175 = vpack.c.b16 %v975, %v971
    %v1176 = vpack.c.b16 %v976, %v972
    %v1177 = vpack.c.b16 %v981, %v977
    %v1178 = vpack.c.b16 %v982, %v978
    %v1179 = vpack.c.b16 %v983, %v979
    %v1180 = vpack.c.b16 %v984, %v980
    %v1181 = vpack.c.b16 %v989, %v985
    %v1182 = vpack.c.b16 %v990, %v986
    %v1183 = vpack.c.b16 %v991, %v987
    %v1184 = vpack.c.b16 %v992, %v988
    %v1185 = vpack.c.b16 %v997, %v993
    %v1186 = vpack.c.b16 %v998, %v994
    %v1187 = vpack.c.b16 %v999, %v995
    %v1188 = vpack.c.b16 %v1000, %v996
    %v1189 = vpack.c.b16 %v1005, %v1001
    %v1190 = vpack.c.b16 %v1006, %v1002
    %v1191 = vpack.c.b16 %v1007, %v1003
    %v1192 = vpack.c.b16 %v1008, %v1004
    %v1193 = vpack.c.b16 %v1013, %v1009
    %v1194 = vpack.c.b16 %v1014, %v1010
    %v1195 = vpack.c.b16 %v1015, %v1011
    %v1196 = vpack.c.b16 %v1016, %v1012
    %v1197 = vpack.c.b16 %v1021, %v1017
    %v1198 = vpack.c.b16 %v1022, %v1018
    %v1199 = vpack.c.b16 %v1023, %v1019
    %v1200 = vpack.c.b16 %v1024, %v1020
    %v1201 = vpack.c.b16 %v1029, %v1025
    %v1202 = vpack.c.b16 %v1030, %v1026
    %v1203 = vpack.c.b16 %v1031, %v1027
    %v1204 = vpack.c.b16 %v1032, %v1028
    %v1205 = vpack.c.b16 %v1037, %v1033
    %v1206 = vpack.c.b16 %v1038, %v1034
    %v1207 = vpack.c.b16 %v1039, %v1035
    %v1208 = vpack.c.b16 %v1040, %v1036
    %v1209 = vpack.c.b16 %v1045, %v1041
    %v1210 = vpack.c.b16 %v1046, %v1042
    %v1211 = vpack.c.b16 %v1047, %v1043
    %v1212 = vpack.c.b16 %v1048, %v1044
    %v1213 = vpack.c.b16 %v1053, %v1049
    %v1214 = vpack.c.b16 %v1054, %v1050
    %v1215 = vpack.c.b16 %v1055, %v1051
    %v1216 = vpack.c.b16 %v1056, %v1052
    %v1217 = vpack.c.b16 %v1061, %v1057
    %v1218 = vpack.c.b16 %v1062, %v1058
    %v1219 = vpack.c.b16 %v1063, %v1059
    %v1220 = vpack.c.b16 %v1064, %v1060
    %v1221 = vpack.c.b16 %v1069, %v1065
    %v1222 = vpack.c.b16 %v1070, %v1066
    %v1223 = vpack.c.b16 %v1071, %v1067
    %v1224 = vpack.c.b16 %v1072, %v1068
    %v1225 = vpack.c.b16 %v1077, %v1073
    %v1226 = vpack.c.b16 %v1078, %v1074
    %v1227 = vpack.c.b16 %v1079, %v1075
    %v1228 = vpack.c.b16 %v1080, %v1076
    %v1229 = vpack.c.b16 %v1085, %v1081
    %v1230 = vpack.c.b16 %v1086, %v1082
    %v1231 = vpack.c.b16 %v1087, %v1083
    %v1232 = vpack.c.b16 %v1088, %v1084
    %v1233 = vpack.c.b16 %v1093, %v1089
    %v1234 = vpack.c.b16 %v1094, %v1090
    %v1235 = vpack.c.b16 %v1095, %v1091
    %v1236 = vpack.c.b16 %v1096, %v1092
    %v1237 = vpack.c.b16 %v1101, %v1097
    %v1238 = vpack.c.b16 %v1102, %v1098
    %v1239 = vpack.c.b16 %v1103, %v1099
    %v1240 = vpack.c.b16 %v1104, %v1100
    %v1241 = vpack.c.b16 %v1109, %v1105
    %v1242 = vpack.c.b16 %v1110, %v1106
    %v1243 = vpack.c.b16 %v1111, %v1107
    %v1244 = vpack.c.b16 %v1112, %v1108
    %v1245 = vpack.c.b16 %v1117, %v1113
    %v1246 = vpack.c.b16 %v1118, %v1114
    %v1247 = vpack.c.b16 %v1119, %v1115
    %v1248 = vpack.c.b16 %v1120, %v1116
    %1377 = vmatprep.subr.bf16.mxu0 %v1122
    %1378 = vmatpush1.bf16.msra.mxu0 %v1121
    %1379 = vmatprep.subr.bf16.mxu0 %v1126
    %1380 = vmatpush1.bf16.msra.mxu0 %v1125
    %1381 = vmatprep.subr.bf16.mxu0 %v1130
    %1382 = vmatpush1.bf16.msra.mxu0 %v1129
    %1383 = vmatprep.subr.bf16.mxu0 %v1134
    %1384 = vmatpush1.bf16.msra.mxu0 %v1133
    %1385 = vmatprep.subr.bf16.mxu0 %v1138
    %1386 = vmatpush1.bf16.msra.mxu0 %v1137
    %1387 = vmatprep.subr.bf16.mxu0 %v1142
    %1388 = vmatpush1.bf16.msra.mxu0 %v1141
    %1389 = vmatprep.subr.bf16.mxu0 %v1146
    %1390 = vmatpush1.bf16.msra.mxu0 %v1145
    %1391 = vmatprep.subr.bf16.mxu0 %v1150
    %1392 = vmatpush1.bf16.msra.mxu0 %v1149
    %1393 = vmatprep.subr.bf16.mxu0 %v1154
    %1394 = vmatpush1.bf16.msra.mxu0 %v1153
    %1395 = vmatprep.subr.bf16.mxu0 %v1158
    %1396 = vmatpush1.bf16.msra.mxu0 %v1157
    %1397 = vmatprep.subr.bf16.mxu0 %v1162
    %1398 = vmatpush1.bf16.msra.mxu0 %v1161
    %1399 = vmatprep.subr.bf16.mxu0 %v1166
    %1400 = vmatpush1.bf16.msra.mxu0 %v1165
    %1401 = vmatprep.subr.bf16.mxu0 %v1170
    %1402 = vmatpush1.bf16.msra.mxu0 %v1169
    %1403 = vmatprep.subr.bf16.mxu0 %v1174
    %1404 = vmatpush1.bf16.msra.mxu0 %v1173
    %1405 = vmatprep.subr.bf16.mxu0 %v1178
    %1406 = vmatpush1.bf16.msra.mxu0 %v1177
    %1407 = vmatprep.subr.bf16.mxu0 %v1182
    %1408 = vmatpush1.bf16.msra.mxu0 %v1181
    %1409 = vmatprep.mubr.bf16.mxu0 %v584
    %1410 = vmatmul.mubr.bf16.gmra.mrb[0].mxu0 %v583
    %v1411 = vpop.f32.mrb[0].mxu0
    %v1412 = vadd.f32 %v720, %v1411
    %v1413 = vpop.f32.mrb[0].mxu0
    %v1414 = vadd.f32 %v724, %v1413
    %v1415 = vpop.f32.mrb[0].mxu0
    %v1416 = vadd.f32 %v720, %v1415
    %v1417 = vpop.f32.mrb[0].mxu0
    %v1418 = vadd.f32 %v724, %v1417
    %1419 = vdwg.mxu0
    %1420 = vmatprep.subr.bf16.mxu0 %v1186
    %1421 = vmatpush1.bf16.msra.mxu0 %v1185
    %1422 = vmatprep.subr.bf16.mxu0 %v1190
    %1423 = vmatpush1.bf16.msra.mxu0 %v1189
    %1424 = vmatprep.subr.bf16.mxu0 %v1194
    %1425 = vmatpush1.bf16.msra.mxu0 %v1193
    %1426 = vmatprep.subr.bf16.mxu0 %v1198
    %1427 = vmatpush1.bf16.msra.mxu0 %v1197
    %1428 = vmatprep.subr.bf16.mxu0 %v1202
    %1429 = vmatpush1.bf16.msra.mxu0 %v1201
    %1430 = vmatprep.subr.bf16.mxu0 %v1206
    %1431 = vmatpush1.bf16.msra.mxu0 %v1205
    %1432 = vmatprep.subr.bf16.mxu0 %v1210
    %1433 = vmatpush1.bf16.msra.mxu0 %v1209
    %1434 = vmatprep.subr.bf16.mxu0 %v1214
    %1435 = vmatpush1.bf16.msra.mxu0 %v1213
    %1436 = vmatprep.subr.bf16.mxu0 %v1218
    %1437 = vmatpush1.bf16.msra.mxu0 %v1217
    %1438 = vmatprep.subr.bf16.mxu0 %v1222
    %1439 = vmatpush1.bf16.msra.mxu0 %v1221
    %1440 = vmatprep.subr.bf16.mxu0 %v1226
    %1441 = vmatpush1.bf16.msra.mxu0 %v1225
    %1442 = vmatprep.subr.bf16.mxu0 %v1230
    %1443 = vmatpush1.bf16.msra.mxu0 %v1229
    %1444 = vmatprep.subr.bf16.mxu0 %v1234
    %1445 = vmatpush1.bf16.msra.mxu0 %v1233
    %1446 = vmatprep.subr.bf16.mxu0 %v1238
    %1447 = vmatpush1.bf16.msra.mxu0 %v1237
    %1448 = vmatprep.subr.bf16.mxu0 %v1242
    %1449 = vmatpush1.bf16.msra.mxu0 %v1241
    %1450 = vmatprep.subr.bf16.mxu0 %v1246
    %1451 = vmatpush1.bf16.msra.mxu0 %v1245
    %1452 = vmatprep.mubr.bf16.mxu0 %v586
    %1453 = vmatmul.mubr.bf16.gmra.mrb[0].mxu0 %v585
    %v1454 = vpop.f32.mrb[0].mxu0
    %v1455 = vadd.f32 %v1412, %v1454
    %v1456 = vpop.f32.mrb[0].mxu0
    %v1457 = vadd.f32 %v1414, %v1456
    %v1458 = vpop.f32.mrb[0].mxu0
    %v1459 = vadd.f32 %v1416, %v1458
    %v1460 = vpop.f32.mrb[0].mxu0
    %v1461 = vadd.f32 %v1418, %v1460
    %1462 = vdwg.mxu0
    %1463 = vmatprep.subr.bf16.mxu0 %v1124
    %1464 = vmatpush1.bf16.msra.mxu0 %v1123
    %1465 = vmatprep.subr.bf16.mxu0 %v1128
    %1466 = vmatpush1.bf16.msra.mxu0 %v1127
    %1467 = vmatprep.subr.bf16.mxu0 %v1132
    %1468 = vmatpush1.bf16.msra.mxu0 %v1131
    %1469 = vmatprep.subr.bf16.mxu0 %v1136
    %1470 = vmatpush1.bf16.msra.mxu0 %v1135
    %1471 = vmatprep.subr.bf16.mxu0 %v1140
    %1472 = vmatpush1.bf16.msra.mxu0 %v1139
    %1473 = vmatprep.subr.bf16.mxu0 %v1144
    %1474 = vmatpush1.bf16.msra.mxu0 %v1143
    %1475 = vmatprep.subr.bf16.mxu0 %v1148
    %1476 = vmatpush1.bf16.msra.mxu0 %v1147
    %1477 = vmatprep.subr.bf16.mxu0 %v1152
    %1478 = vmatpush1.bf16.msra.mxu0 %v1151
    %1479 = vmatprep.subr.bf16.mxu0 %v1156
    %1480 = vmatpush1.bf16.msra.mxu0 %v1155
    %1481 = vmatprep.subr.bf16.mxu0 %v1160
    %1482 = vmatpush1.bf16.msra.mxu0 %v1159
    %1483 = vmatprep.subr.bf16.mxu0 %v1164
    %1484 = vmatpush1.bf16.msra.mxu0 %v1163
    %1485 = vmatprep.subr.bf16.mxu0 %v1168
    %1486 = vmatpush1.bf16.msra.mxu0 %v1167
    %1487 = vmatprep.subr.bf16.mxu0 %v1172
    %1488 = vmatpush1.bf16.msra.mxu0 %v1171
    %1489 = vmatprep.subr.bf16.mxu0 %v1176
    %1490 = vmatpush1.bf16.msra.mxu0 %v1175
    %1491 = vmatprep.subr.bf16.mxu0 %v1180
    %1492 = vmatpush1.bf16.msra.mxu0 %v1179
    %1493 = vmatprep.subr.bf16.mxu0 %v1184
    %1494 = vmatpush1.bf16.msra.mxu0 %v1183
    %1495 = vmatprep.mubr.bf16.mxu0 %v584
    %1496 = vmatmul.mubr.bf16.gmra.mrb[0].mxu0 %v583
    %v1497 = vpop.f32.mrb[0].mxu0
    %v1498 = vadd.f32 %v728, %v1497
    %v1499 = vpop.f32.mrb[0].mxu0
    %v1500 = vadd.f32 %v732, %v1499
    %v1501 = vpop.f32.mrb[0].mxu0
    %v1502 = vadd.f32 %v728, %v1501
    %v1503 = vpop.f32.mrb[0].mxu0
    %v1504 = vadd.f32 %v732, %v1503
    %1505 = vdwg.mxu0
    %1506 = vmatprep.subr.bf16.mxu0 %v1188
    %1507 = vmatpush1.bf16.msra.mxu0 %v1187
    %1508 = vmatprep.subr.bf16.mxu0 %v1192
    %1509 = vmatpush1.bf16.msra.mxu0 %v1191
    %1510 = vmatprep.subr.bf16.mxu0 %v1196
    %1511 = vmatpush1.bf16.msra.mxu0 %v1195
    %1512 = vmatprep.subr.bf16.mxu0 %v1200
    %1513 = vmatpush1.bf16.msra.mxu0 %v1199
    %1514 = vmatprep.subr.bf16.mxu0 %v1204
    %1515 = vmatpush1.bf16.msra.mxu0 %v1203
    %1516 = vmatprep.subr.bf16.mxu0 %v1208
    %1517 = vmatpush1.bf16.msra.mxu0 %v1207
    %1518 = vmatprep.subr.bf16.mxu0 %v1212
    %1519 = vmatpush1.bf16.msra.mxu0 %v1211
    %1520 = vmatprep.subr.bf16.mxu0 %v1216
    %1521 = vmatpush1.bf16.msra.mxu0 %v1215
    %1522 = vmatprep.subr.bf16.mxu0 %v1220
    %1523 = vmatpush1.bf16.msra.mxu0 %v1219
    %1524 = vmatprep.subr.bf16.mxu0 %v1224
    %1525 = vmatpush1.bf16.msra.mxu0 %v1223
    %1526 = vmatprep.subr.bf16.mxu0 %v1228
    %1527 = vmatpush1.bf16.msra.mxu0 %v1227
    %1528 = vmatprep.subr.bf16.mxu0 %v1232
    %1529 = vmatpush1.bf16.msra.mxu0 %v1231
    %1530 = vmatprep.subr.bf16.mxu0 %v1236
    %1531 = vmatpush1.bf16.msra.mxu0 %v1235
    %1532 = vmatprep.subr.bf16.mxu0 %v1240
    %1533 = vmatpush1.bf16.msra.mxu0 %v1239
    %1534 = vmatprep.subr.bf16.mxu0 %v1244
    %1535 = vmatpush1.bf16.msra.mxu0 %v1243
    %1536 = vmatprep.subr.bf16.mxu0 %v1248
    %1537 = vmatpush1.bf16.msra.mxu0 %v1247
    %1538 = vmatprep.mubr.bf16.mxu0 %v586
    %1539 = vmatmul.mubr.bf16.gmra.mrb[0].mxu0 %v585
    %v1540 = vpop.f32.mrb[0].mxu0
    %v1541 = vadd.f32 %v1498, %v1540
    %v1542 = vpop.f32.mrb[0].mxu0
    %v1543 = vadd.f32 %v1500, %v1542
    %v1544 = vpop.f32.mrb[0].mxu0
    %v1545 = vadd.f32 %v1502, %v1544
    %v1546 = vpop.f32.mrb[0].mxu0
    %v1547 = vadd.f32 %v1504, %v1546
    %1548 = vdwg.mxu0
    %vm1549 = vcmp.ge.f32.partialorder %v1455, 0.0
    %vm1550 = vcmp.ge.f32.partialorder %v1457, 0.0
    %vm1551 = vcmp.ge.f32.partialorder %v1541, 0.0
    %vm1552 = vcmp.ge.f32.partialorder %v1543, 0.0
    %vm1553 = vcmp.ge.f32.partialorder %v1459, 0.0
    %vm1554 = vcmp.ge.f32.partialorder %v1461, 0.0
    %vm1555 = vcmp.ge.f32.partialorder %v1545, 0.0
    %vm1556 = vcmp.ge.f32.partialorder %v1547, 0.0
    %v1557 = vmul.f32 %v1455, 0.2
    %v1558 = vmul.f32 %v1457, 0.2
    %v1559 = vmul.f32 %v1541, 0.2
    %v1560 = vmul.f32 %v1543, 0.2
    %v1561 = vmul.f32 %v1459, 0.2
    %v1562 = vmul.f32 %v1461, 0.2
    %v1563 = vmul.f32 %v1545, 0.2
    %v1564 = vmul.f32 %v1547, 0.2
    %v1565 = vsel %vm1549, %v1455, %v1557
    %v1566 = vsel %vm1550, %v1457, %v1558
    %v1567 = vsel %vm1551, %v1541, %v1559
    %v1568 = vsel %vm1552, %v1543, %v1560
    %v1569 = vsel %vm1553, %v1459, %v1561
    %v1570 = vsel %vm1554, %v1461, %v1562
    %v1571 = vsel %vm1555, %v1545, %v1563
    %v1572 = vsel %vm1556, %v1547, %v1564
    %v1573 = vpack.c.bf16 %v1569, %v1565
    %v1574 = vpack.c.bf16 %v1570, %v1566
    %v1575 = vpack.c.bf16 %v1571, %v1567
    %v1576 = vpack.c.bf16 %v1572, %v1568
    %v1577 = vld [vmem:[#allocation7] sm:$0xff]
    %v1578 = vld [vmem:[#allocation7 + $0x8] sm:$0xff]
    %v1579 = vld [vmem:[#allocation7 + $0x10] sm:$0xff]
    %v1580 = vld [vmem:[#allocation7 + $0x18] sm:$0xff]
    %v1581 = vld [vmem:[#allocation7 + $0x20] sm:$0xff]
    %v1582 = vld [vmem:[#allocation7 + $0x28] sm:$0xff]
    %v1583 = vld [vmem:[#allocation7 + $0x30] sm:$0xff]
    %v1584 = vld [vmem:[#allocation7 + $0x38] sm:$0xff]
    %v1585 = vld [vmem:[#allocation7 + $0x40] sm:$0xff]
    %v1586 = vld [vmem:[#allocation7 + $0x48] sm:$0xff]
    %v1587 = vld [vmem:[#allocation7 + $0x50] sm:$0xff]
    %v1588 = vld [vmem:[#allocation7 + $0x58] sm:$0xff]
    %v1589 = vld [vmem:[#allocation7 + $0x60] sm:$0xff]
    %v1590 = vld [vmem:[#allocation7 + $0x68] sm:$0xff]
    %v1591 = vld [vmem:[#allocation7 + $0x70] sm:$0xff]
    %v1592 = vld [vmem:[#allocation7 + $0x78] sm:$0xff]
    %v1593 = vld [vmem:[#allocation7 + $0x80] sm:$0xff]
    %v1594 = vld [vmem:[#allocation7 + $0x88] sm:$0xff]
    %v1595 = vld [vmem:[#allocation7 + $0x90] sm:$0xff]
    %v1596 = vld [vmem:[#allocation7 + $0x98] sm:$0xff]
    %v1597 = vld [vmem:[#allocation7 + $0xa0] sm:$0xff]
    %v1598 = vld [vmem:[#allocation7 + $0xa8] sm:$0xff]
    %v1599 = vld [vmem:[#allocation7 + $0xb0] sm:$0xff]
    %v1600 = vld [vmem:[#allocation7 + $0xb8] sm:$0xff]
    %v1601 = vld [vmem:[#allocation7 + $0xc0] sm:$0xff]
    %v1602 = vld [vmem:[#allocation7 + $0xc8] sm:$0xff]
    %v1603 = vld [vmem:[#allocation7 + $0xd0] sm:$0xff]
    %v1604 = vld [vmem:[#allocation7 + $0xd8] sm:$0xff]
    %v1605 = vld [vmem:[#allocation7 + $0xe0] sm:$0xff]
    %v1606 = vld [vmem:[#allocation7 + $0xe8] sm:$0xff]
    %v1607 = vld [vmem:[#allocation7 + $0xf0] sm:$0xff]
    %v1608 = vld [vmem:[#allocation7 + $0xf8] sm:$0xff]
    %v1609 = vld [vmem:[#allocation7 + $0x100] sm:$0xff]
    %v1610 = vld [vmem:[#allocation7 + $0x108] sm:$0xff]
    %v1611 = vld [vmem:[#allocation7 + $0x110] sm:$0xff]
    %v1612 = vld [vmem:[#allocation7 + $0x118] sm:$0xff]
    %v1613 = vld [vmem:[#allocation7 + $0x120] sm:$0xff]
    %v1614 = vld [vmem:[#allocation7 + $0x128] sm:$0xff]
    %v1615 = vld [vmem:[#allocation7 + $0x130] sm:$0xff]
    %v1616 = vld [vmem:[#allocation7 + $0x138] sm:$0xff]
    %v1617 = vld [vmem:[#allocation7 + $0x140] sm:$0xff]
    %v1618 = vld [vmem:[#allocation7 + $0x148] sm:$0xff]
    %v1619 = vld [vmem:[#allocation7 + $0x150] sm:$0xff]
    %v1620 = vld [vmem:[#allocation7 + $0x158] sm:$0xff]
    %v1621 = vld [vmem:[#allocation7 + $0x160] sm:$0xff]
    %v1622 = vld [vmem:[#allocation7 + $0x168] sm:$0xff]
    %v1623 = vld [vmem:[#allocation7 + $0x170] sm:$0xff]
    %v1624 = vld [vmem:[#allocation7 + $0x178] sm:$0xff]
    %v1625 = vld [vmem:[#allocation7 + $0x180] sm:$0xff]
    %v1626 = vld [vmem:[#allocation7 + $0x188] sm:$0xff]
    %v1627 = vld [vmem:[#allocation7 + $0x190] sm:$0xff]
    %v1628 = vld [vmem:[#allocation7 + $0x198] sm:$0xff]
    %v1629 = vld [vmem:[#allocation7 + $0x1a0] sm:$0xff]
    %v1630 = vld [vmem:[#allocation7 + $0x1a8] sm:$0xff]
    %v1631 = vld [vmem:[#allocation7 + $0x1b0] sm:$0xff]
    %v1632 = vld [vmem:[#allocation7 + $0x1b8] sm:$0xff]
    %v1633 = vld [vmem:[#allocation7 + $0x1c0] sm:$0xff]
    %v1634 = vld [vmem:[#allocation7 + $0x1c8] sm:$0xff]
    %v1635 = vld [vmem:[#allocation7 + $0x1d0] sm:$0xff]
    %v1636 = vld [vmem:[#allocation7 + $0x1d8] sm:$0xff]
    %v1637 = vld [vmem:[#allocation7 + $0x1e0] sm:$0xff]
    %v1638 = vld [vmem:[#allocation7 + $0x1e8] sm:$0xff]
    %v1639 = vld [vmem:[#allocation7 + $0x1f0] sm:$0xff]
    %v1640 = vld [vmem:[#allocation7 + $0x1f8] sm:$0xff]
    %v1641 = vld [vmem:[#allocation7 + $0x200] sm:$0xff]
    %v1642 = vld [vmem:[#allocation7 + $0x208] sm:$0xff]
    %v1643 = vld [vmem:[#allocation7 + $0x210] sm:$0xff]
    %v1644 = vld [vmem:[#allocation7 + $0x218] sm:$0xff]
    %v1645 = vld [vmem:[#allocation7 + $0x220] sm:$0xff]
    %v1646 = vld [vmem:[#allocation7 + $0x228] sm:$0xff]
    %v1647 = vld [vmem:[#allocation7 + $0x230] sm:$0xff]
    %v1648 = vld [vmem:[#allocation7 + $0x238] sm:$0xff]
    %v1649 = vld [vmem:[#allocation7 + $0x240] sm:$0xff]
    %v1650 = vld [vmem:[#allocation7 + $0x248] sm:$0xff]
    %v1651 = vld [vmem:[#allocation7 + $0x250] sm:$0xff]
    %v1652 = vld [vmem:[#allocation7 + $0x258] sm:$0xff]
    %v1653 = vld [vmem:[#allocation7 + $0x260] sm:$0xff]
    %v1654 = vld [vmem:[#allocation7 + $0x268] sm:$0xff]
    %v1655 = vld [vmem:[#allocation7 + $0x270] sm:$0xff]
    %v1656 = vld [vmem:[#allocation7 + $0x278] sm:$0xff]
    %v1657 = vld [vmem:[#allocation7 + $0x280] sm:$0xff]
    %v1658 = vld [vmem:[#allocation7 + $0x288] sm:$0xff]
    %v1659 = vld [vmem:[#allocation7 + $0x290] sm:$0xff]
    %v1660 = vld [vmem:[#allocation7 + $0x298] sm:$0xff]
    %v1661 = vld [vmem:[#allocation7 + $0x2a0] sm:$0xff]
    %v1662 = vld [vmem:[#allocation7 + $0x2a8] sm:$0xff]
    %v1663 = vld [vmem:[#allocation7 + $0x2b0] sm:$0xff]
    %v1664 = vld [vmem:[#allocation7 + $0x2b8] sm:$0xff]
    %v1665 = vld [vmem:[#allocation7 + $0x2c0] sm:$0xff]
    %v1666 = vld [vmem:[#allocation7 + $0x2c8] sm:$0xff]
    %v1667 = vld [vmem:[#allocation7 + $0x2d0] sm:$0xff]
    %v1668 = vld [vmem:[#allocation7 + $0x2d8] sm:$0xff]
    %v1669 = vld [vmem:[#allocation7 + $0x2e0] sm:$0xff]
    %v1670 = vld [vmem:[#allocation7 + $0x2e8] sm:$0xff]
    %v1671 = vld [vmem:[#allocation7 + $0x2f0] sm:$0xff]
    %v1672 = vld [vmem:[#allocation7 + $0x2f8] sm:$0xff]
    %v1673 = vld [vmem:[#allocation7 + $0x300] sm:$0xff]
    %v1674 = vld [vmem:[#allocation7 + $0x308] sm:$0xff]
    %v1675 = vld [vmem:[#allocation7 + $0x310] sm:$0xff]
    %v1676 = vld [vmem:[#allocation7 + $0x318] sm:$0xff]
    %v1677 = vld [vmem:[#allocation7 + $0x320] sm:$0xff]
    %v1678 = vld [vmem:[#allocation7 + $0x328] sm:$0xff]
    %v1679 = vld [vmem:[#allocation7 + $0x330] sm:$0xff]
    %v1680 = vld [vmem:[#allocation7 + $0x338] sm:$0xff]
    %v1681 = vld [vmem:[#allocation7 + $0x340] sm:$0xff]
    %v1682 = vld [vmem:[#allocation7 + $0x348] sm:$0xff]
    %v1683 = vld [vmem:[#allocation7 + $0x350] sm:$0xff]
    %v1684 = vld [vmem:[#allocation7 + $0x358] sm:$0xff]
    %v1685 = vld [vmem:[#allocation7 + $0x360] sm:$0xff]
    %v1686 = vld [vmem:[#allocation7 + $0x368] sm:$0xff]
    %v1687 = vld [vmem:[#allocation7 + $0x370] sm:$0xff]
    %v1688 = vld [vmem:[#allocation7 + $0x378] sm:$0xff]
    %v1689 = vld [vmem:[#allocation7 + $0x380] sm:$0xff]
    %v1690 = vld [vmem:[#allocation7 + $0x388] sm:$0xff]
    %v1691 = vld [vmem:[#allocation7 + $0x390] sm:$0xff]
    %v1692 = vld [vmem:[#allocation7 + $0x398] sm:$0xff]
    %v1693 = vld [vmem:[#allocation7 + $0x3a0] sm:$0xff]
    %v1694 = vld [vmem:[#allocation7 + $0x3a8] sm:$0xff]
    %v1695 = vld [vmem:[#allocation7 + $0x3b0] sm:$0xff]
    %v1696 = vld [vmem:[#allocation7 + $0x3b8] sm:$0xff]
    %v1697 = vld [vmem:[#allocation7 + $0x3c0] sm:$0xff]
    %v1698 = vld [vmem:[#allocation7 + $0x3c8] sm:$0xff]
    %v1699 = vld [vmem:[#allocation7 + $0x3d0] sm:$0xff]
    %v1700 = vld [vmem:[#allocation7 + $0x3d8] sm:$0xff]
    %v1701 = vld [vmem:[#allocation7 + $0x3e0] sm:$0xff]
    %v1702 = vld [vmem:[#allocation7 + $0x3e8] sm:$0xff]
    %v1703 = vld [vmem:[#allocation7 + $0x3f0] sm:$0xff]
    %v1704 = vld [vmem:[#allocation7 + $0x3f8] sm:$0xff]
    %v1705 = vld [vmem:[%s6] sm:$0xf]
    %v1707 = vlaneseq
    %v1708 = vshrl.u32 %v1707, 7
    %v1709 = vsub.s32 0, %v1708
    %v1710 = vrot.slane %v1705, %v1709
    %v1711 = vlaneseq
    %v1712 = vshrl.u32 %v1711, 7
    %v1713 = vsub.s32 1, %v1712
    %v1714 = vrot.slane %v1705, %v1713
    %v1715 = vlaneseq
    %v1716 = vshrl.u32 %v1715, 7
    %v1717 = vsub.s32 2, %v1716
    %v1718 = vrot.slane %v1705, %v1717
    %v1719 = vlaneseq
    %v1720 = vshrl.u32 %v1719, 7
    %v1721 = vsub.s32 3, %v1720
    %v1722 = vrot.slane %v1705, %v1721
    %v1855 = vunpack.c.l.b16 %v1577
    %v1856 = vunpack.c.h.b16 %v1577
    %v1857 = vunpack.c.l.b16 %v1578
    %v1858 = vunpack.c.h.b16 %v1578
    %v1859 = vunpack.c.l.b16 %v1579
    %v1860 = vunpack.c.h.b16 %v1579
    %v1861 = vunpack.c.l.b16 %v1580
    %v1862 = vunpack.c.h.b16 %v1580
    %v1863 = vunpack.c.l.b16 %v1581
    %v1864 = vunpack.c.h.b16 %v1581
    %v1865 = vunpack.c.l.b16 %v1582
    %v1866 = vunpack.c.h.b16 %v1582
    %v1867 = vunpack.c.l.b16 %v1583
    %v1868 = vunpack.c.h.b16 %v1583
    %v1869 = vunpack.c.l.b16 %v1584
    %v1870 = vunpack.c.h.b16 %v1584
    %v1871 = vunpack.c.l.b16 %v1585
    %v1872 = vunpack.c.h.b16 %v1585
    %v1873 = vunpack.c.l.b16 %v1586
    %v1874 = vunpack.c.h.b16 %v1586
    %v1875 = vunpack.c.l.b16 %v1587
    %v1876 = vunpack.c.h.b16 %v1587
    %v1877 = vunpack.c.l.b16 %v1588
    %v1878 = vunpack.c.h.b16 %v1588
    %v1879 = vunpack.c.l.b16 %v1589
    %v1880 = vunpack.c.h.b16 %v1589
    %v1881 = vunpack.c.l.b16 %v1590
    %v1882 = vunpack.c.h.b16 %v1590
    %v1883 = vunpack.c.l.b16 %v1591
    %v1884 = vunpack.c.h.b16 %v1591
    %v1885 = vunpack.c.l.b16 %v1592
    %v1886 = vunpack.c.h.b16 %v1592
    %v1887 = vunpack.c.l.b16 %v1593
    %v1888 = vunpack.c.h.b16 %v1593
    %v1889 = vunpack.c.l.b16 %v1594
    %v1890 = vunpack.c.h.b16 %v1594
    %v1891 = vunpack.c.l.b16 %v1595
    %v1892 = vunpack.c.h.b16 %v1595
    %v1893 = vunpack.c.l.b16 %v1596
    %v1894 = vunpack.c.h.b16 %v1596
    %v1895 = vunpack.c.l.b16 %v1597
    %v1896 = vunpack.c.h.b16 %v1597
    %v1897 = vunpack.c.l.b16 %v1598
    %v1898 = vunpack.c.h.b16 %v1598
    %v1899 = vunpack.c.l.b16 %v1599
    %v1900 = vunpack.c.h.b16 %v1599
    %v1901 = vunpack.c.l.b16 %v1600
    %v1902 = vunpack.c.h.b16 %v1600
    %v1903 = vunpack.c.l.b16 %v1601
    %v1904 = vunpack.c.h.b16 %v1601
    %v1905 = vunpack.c.l.b16 %v1602
    %v1906 = vunpack.c.h.b16 %v1602
    %v1907 = vunpack.c.l.b16 %v1603
    %v1908 = vunpack.c.h.b16 %v1603
    %v1909 = vunpack.c.l.b16 %v1604
    %v1910 = vunpack.c.h.b16 %v1604
    %v1911 = vunpack.c.l.b16 %v1605
    %v1912 = vunpack.c.h.b16 %v1605
    %v1913 = vunpack.c.l.b16 %v1606
    %v1914 = vunpack.c.h.b16 %v1606
    %v1915 = vunpack.c.l.b16 %v1607
    %v1916 = vunpack.c.h.b16 %v1607
    %v1917 = vunpack.c.l.b16 %v1608
    %v1918 = vunpack.c.h.b16 %v1608
    %v1919 = vunpack.c.l.b16 %v1609
    %v1920 = vunpack.c.h.b16 %v1609
    %v1921 = vunpack.c.l.b16 %v1610
    %v1922 = vunpack.c.h.b16 %v1610
    %v1923 = vunpack.c.l.b16 %v1611
    %v1924 = vunpack.c.h.b16 %v1611
    %v1925 = vunpack.c.l.b16 %v1612
    %v1926 = vunpack.c.h.b16 %v1612
    %v1927 = vunpack.c.l.b16 %v1613
    %v1928 = vunpack.c.h.b16 %v1613
    %v1929 = vunpack.c.l.b16 %v1614
    %v1930 = vunpack.c.h.b16 %v1614
    %v1931 = vunpack.c.l.b16 %v1615
    %v1932 = vunpack.c.h.b16 %v1615
    %v1933 = vunpack.c.l.b16 %v1616
    %v1934 = vunpack.c.h.b16 %v1616
    %v1935 = vunpack.c.l.b16 %v1617
    %v1936 = vunpack.c.h.b16 %v1617
    %v1937 = vunpack.c.l.b16 %v1618
    %v1938 = vunpack.c.h.b16 %v1618
    %v1939 = vunpack.c.l.b16 %v1619
    %v1940 = vunpack.c.h.b16 %v1619
    %v1941 = vunpack.c.l.b16 %v1620
    %v1942 = vunpack.c.h.b16 %v1620
    %v1943 = vunpack.c.l.b16 %v1621
    %v1944 = vunpack.c.h.b16 %v1621
    %v1945 = vunpack.c.l.b16 %v1622
    %v1946 = vunpack.c.h.b16 %v1622
    %v1947 = vunpack.c.l.b16 %v1623
    %v1948 = vunpack.c.h.b16 %v1623
    %v1949 = vunpack.c.l.b16 %v1624
    %v1950 = vunpack.c.h.b16 %v1624
    %v1951 = vunpack.c.l.b16 %v1625
    %v1952 = vunpack.c.h.b16 %v1625
    %v1953 = vunpack.c.l.b16 %v1626
    %v1954 = vunpack.c.h.b16 %v1626
    %v1955 = vunpack.c.l.b16 %v1627
    %v1956 = vunpack.c.h.b16 %v1627
    %v1957 = vunpack.c.l.b16 %v1628
    %v1958 = vunpack.c.h.b16 %v1628
    %v1959 = vunpack.c.l.b16 %v1629
    %v1960 = vunpack.c.h.b16 %v1629
    %v1961 = vunpack.c.l.b16 %v1630
    %v1962 = vunpack.c.h.b16 %v1630
    %v1963 = vunpack.c.l.b16 %v1631
    %v1964 = vunpack.c.h.b16 %v1631
    %v1965 = vunpack.c.l.b16 %v1632
    %v1966 = vunpack.c.h.b16 %v1632
    %v1967 = vunpack.c.l.b16 %v1633
    %v1968 = vunpack.c.h.b16 %v1633
    %v1969 = vunpack.c.l.b16 %v1634
    %v1970 = vunpack.c.h.b16 %v1634
    %v1971 = vunpack.c.l.b16 %v1635
    %v1972 = vunpack.c.h.b16 %v1635
    %v1973 = vunpack.c.l.b16 %v1636
    %v1974 = vunpack.c.h.b16 %v1636
    %v1975 = vunpack.c.l.b16 %v1637
    %v1976 = vunpack.c.h.b16 %v1637
    %v1977 = vunpack.c.l.b16 %v1638
    %v1978 = vunpack.c.h.b16 %v1638
    %v1979 = vunpack.c.l.b16 %v1639
    %v1980 = vunpack.c.h.b16 %v1639
    %v1981 = vunpack.c.l.b16 %v1640
    %v1982 = vunpack.c.h.b16 %v1640
    %v1983 = vunpack.c.l.b16 %v1641
    %v1984 = vunpack.c.h.b16 %v1641
    %v1985 = vunpack.c.l.b16 %v1642
    %v1986 = vunpack.c.h.b16 %v1642
    %v1987 = vunpack.c.l.b16 %v1643
    %v1988 = vunpack.c.h.b16 %v1643
    %v1989 = vunpack.c.l.b16 %v1644
    %v1990 = vunpack.c.h.b16 %v1644
    %v1991 = vunpack.c.l.b16 %v1645
    %v1992 = vunpack.c.h.b16 %v1645
    %v1993 = vunpack.c.l.b16 %v1646
    %v1994 = vunpack.c.h.b16 %v1646
    %v1995 = vunpack.c.l.b16 %v1647
    %v1996 = vunpack.c.h.b16 %v1647
    %v1997 = vunpack.c.l.b16 %v1648
    %v1998 = vunpack.c.h.b16 %v1648
    %v1999 = vunpack.c.l.b16 %v1649
    %v2000 = vunpack.c.h.b16 %v1649
    %v2001 = vunpack.c.l.b16 %v1650
    %v2002 = vunpack.c.h.b16 %v1650
    %v2003 = vunpack.c.l.b16 %v1651
    %v2004 = vunpack.c.h.b16 %v1651
    %v2005 = vunpack.c.l.b16 %v1652
    %v2006 = vunpack.c.h.b16 %v1652
    %v2007 = vunpack.c.l.b16 %v1653
    %v2008 = vunpack.c.h.b16 %v1653
    %v2009 = vunpack.c.l.b16 %v1654
    %v2010 = vunpack.c.h.b16 %v1654
    %v2011 = vunpack.c.l.b16 %v1655
    %v2012 = vunpack.c.h.b16 %v1655
    %v2013 = vunpack.c.l.b16 %v1656
    %v2014 = vunpack.c.h.b16 %v1656
    %v2015 = vunpack.c.l.b16 %v1657
    %v2016 = vunpack.c.h.b16 %v1657
    %v2017 = vunpack.c.l.b16 %v1658
    %v2018 = vunpack.c.h.b16 %v1658
    %v2019 = vunpack.c.l.b16 %v1659
    %v2020 = vunpack.c.h.b16 %v1659
    %v2021 = vunpack.c.l.b16 %v1660
    %v2022 = vunpack.c.h.b16 %v1660
    %v2023 = vunpack.c.l.b16 %v1661
    %v2024 = vunpack.c.h.b16 %v1661
    %v2025 = vunpack.c.l.b16 %v1662
    %v2026 = vunpack.c.h.b16 %v1662
    %v2027 = vunpack.c.l.b16 %v1663
    %v2028 = vunpack.c.h.b16 %v1663
    %v2029 = vunpack.c.l.b16 %v1664
    %v2030 = vunpack.c.h.b16 %v1664
    %v2031 = vunpack.c.l.b16 %v1665
    %v2032 = vunpack.c.h.b16 %v1665
    %v2033 = vunpack.c.l.b16 %v1666
    %v2034 = vunpack.c.h.b16 %v1666
    %v2035 = vunpack.c.l.b16 %v1667
    %v2036 = vunpack.c.h.b16 %v1667
    %v2037 = vunpack.c.l.b16 %v1668
    %v2038 = vunpack.c.h.b16 %v1668
    %v2039 = vunpack.c.l.b16 %v1669
    %v2040 = vunpack.c.h.b16 %v1669
    %v2041 = vunpack.c.l.b16 %v1670
    %v2042 = vunpack.c.h.b16 %v1670
    %v2043 = vunpack.c.l.b16 %v1671
    %v2044 = vunpack.c.h.b16 %v1671
    %v2045 = vunpack.c.l.b16 %v1672
    %v2046 = vunpack.c.h.b16 %v1672
    %v2047 = vunpack.c.l.b16 %v1673
    %v2048 = vunpack.c.h.b16 %v1673
    %v2049 = vunpack.c.l.b16 %v1674
    %v2050 = vunpack.c.h.b16 %v1674
    %v2051 = vunpack.c.l.b16 %v1675
    %v2052 = vunpack.c.h.b16 %v1675
    %v2053 = vunpack.c.l.b16 %v1676
    %v2054 = vunpack.c.h.b16 %v1676
    %v2055 = vunpack.c.l.b16 %v1677
    %v2056 = vunpack.c.h.b16 %v1677
    %v2057 = vunpack.c.l.b16 %v1678
    %v2058 = vunpack.c.h.b16 %v1678
    %v2059 = vunpack.c.l.b16 %v1679
    %v2060 = vunpack.c.h.b16 %v1679
    %v2061 = vunpack.c.l.b16 %v1680
    %v2062 = vunpack.c.h.b16 %v1680
    %v2063 = vunpack.c.l.b16 %v1681
    %v2064 = vunpack.c.h.b16 %v1681
    %v2065 = vunpack.c.l.b16 %v1682
    %v2066 = vunpack.c.h.b16 %v1682
    %v2067 = vunpack.c.l.b16 %v1683
    %v2068 = vunpack.c.h.b16 %v1683
    %v2069 = vunpack.c.l.b16 %v1684
    %v2070 = vunpack.c.h.b16 %v1684
    %v2071 = vunpack.c.l.b16 %v1685
    %v2072 = vunpack.c.h.b16 %v1685
    %v2073 = vunpack.c.l.b16 %v1686
    %v2074 = vunpack.c.h.b16 %v1686
    %v2075 = vunpack.c.l.b16 %v1687
    %v2076 = vunpack.c.h.b16 %v1687
    %v2077 = vunpack.c.l.b16 %v1688
    %v2078 = vunpack.c.h.b16 %v1688
    %v2079 = vunpack.c.l.b16 %v1689
    %v2080 = vunpack.c.h.b16 %v1689
    %v2081 = vunpack.c.l.b16 %v1690
    %v2082 = vunpack.c.h.b16 %v1690
    %v2083 = vunpack.c.l.b16 %v1691
    %v2084 = vunpack.c.h.b16 %v1691
    %v2085 = vunpack.c.l.b16 %v1692
    %v2086 = vunpack.c.h.b16 %v1692
    %v2087 = vunpack.c.l.b16 %v1693
    %v2088 = vunpack.c.h.b16 %v1693
    %v2089 = vunpack.c.l.b16 %v1694
    %v2090 = vunpack.c.h.b16 %v1694
    %v2091 = vunpack.c.l.b16 %v1695
    %v2092 = vunpack.c.h.b16 %v1695
    %v2093 = vunpack.c.l.b16 %v1696
    %v2094 = vunpack.c.h.b16 %v1696
    %v2095 = vunpack.c.l.b16 %v1697
    %v2096 = vunpack.c.h.b16 %v1697
    %v2097 = vunpack.c.l.b16 %v1698
    %v2098 = vunpack.c.h.b16 %v1698
    %v2099 = vunpack.c.l.b16 %v1699
    %v2100 = vunpack.c.h.b16 %v1699
    %v2101 = vunpack.c.l.b16 %v1700
    %v2102 = vunpack.c.h.b16 %v1700
    %v2103 = vunpack.c.l.b16 %v1701
    %v2104 = vunpack.c.h.b16 %v1701
    %v2105 = vunpack.c.l.b16 %v1702
    %v2106 = vunpack.c.h.b16 %v1702
    %v2107 = vunpack.c.l.b16 %v1703
    %v2108 = vunpack.c.h.b16 %v1703
    %v2109 = vunpack.c.l.b16 %v1704
    %v2110 = vunpack.c.h.b16 %v1704
    %v2111 = vpack.c.b16 %v1859, %v1855
    %v2112 = vpack.c.b16 %v1860, %v1856
    %v2113 = vpack.c.b16 %v1861, %v1857
    %v2114 = vpack.c.b16 %v1862, %v1858
    %v2115 = vpack.c.b16 %v1867, %v1863
    %v2116 = vpack.c.b16 %v1868, %v1864
    %v2117 = vpack.c.b16 %v1869, %v1865
    %v2118 = vpack.c.b16 %v1870, %v1866
    %v2119 = vpack.c.b16 %v1875, %v1871
    %v2120 = vpack.c.b16 %v1876, %v1872
    %v2121 = vpack.c.b16 %v1877, %v1873
    %v2122 = vpack.c.b16 %v1878, %v1874
    %v2123 = vpack.c.b16 %v1883, %v1879
    %v2124 = vpack.c.b16 %v1884, %v1880
    %v2125 = vpack.c.b16 %v1885, %v1881
    %v2126 = vpack.c.b16 %v1886, %v1882
    %v2127 = vpack.c.b16 %v1891, %v1887
    %v2128 = vpack.c.b16 %v1892, %v1888
    %v2129 = vpack.c.b16 %v1893, %v1889
    %v2130 = vpack.c.b16 %v1894, %v1890
    %v2131 = vpack.c.b16 %v1899, %v1895
    %v2132 = vpack.c.b16 %v1900, %v1896
    %v2133 = vpack.c.b16 %v1901, %v1897
    %v2134 = vpack.c.b16 %v1902, %v1898
    %v2135 = vpack.c.b16 %v1907, %v1903
    %v2136 = vpack.c.b16 %v1908, %v1904
    %v2137 = vpack.c.b16 %v1909, %v1905
    %v2138 = vpack.c.b16 %v1910, %v1906
    %v2139 = vpack.c.b16 %v1915, %v1911
    %v2140 = vpack.c.b16 %v1916, %v1912
    %v2141 = vpack.c.b16 %v1917, %v1913
    %v2142 = vpack.c.b16 %v1918, %v1914
    %v2143 = vpack.c.b16 %v1923, %v1919
    %v2144 = vpack.c.b16 %v1924, %v1920
    %v2145 = vpack.c.b16 %v1925, %v1921
    %v2146 = vpack.c.b16 %v1926, %v1922
    %v2147 = vpack.c.b16 %v1931, %v1927
    %v2148 = vpack.c.b16 %v1932, %v1928
    %v2149 = vpack.c.b16 %v1933, %v1929
    %v2150 = vpack.c.b16 %v1934, %v1930
    %v2151 = vpack.c.b16 %v1939, %v1935
    %v2152 = vpack.c.b16 %v1940, %v1936
    %v2153 = vpack.c.b16 %v1941, %v1937
    %v2154 = vpack.c.b16 %v1942, %v1938
    %v2155 = vpack.c.b16 %v1947, %v1943
    %v2156 = vpack.c.b16 %v1948, %v1944
    %v2157 = vpack.c.b16 %v1949, %v1945
    %v2158 = vpack.c.b16 %v1950, %v1946
    %v2159 = vpack.c.b16 %v1955, %v1951
    %v2160 = vpack.c.b16 %v1956, %v1952
    %v2161 = vpack.c.b16 %v1957, %v1953
    %v2162 = vpack.c.b16 %v1958, %v1954
    %v2163 = vpack.c.b16 %v1963, %v1959
    %v2164 = vpack.c.b16 %v1964, %v1960
    %v2165 = vpack.c.b16 %v1965, %v1961
    %v2166 = vpack.c.b16 %v1966, %v1962
    %v2167 = vpack.c.b16 %v1971, %v1967
    %v2168 = vpack.c.b16 %v1972, %v1968
    %v2169 = vpack.c.b16 %v1973, %v1969
    %v2170 = vpack.c.b16 %v1974, %v1970
    %v2171 = vpack.c.b16 %v1979, %v1975
    %v2172 = vpack.c.b16 %v1980, %v1976
    %v2173 = vpack.c.b16 %v1981, %v1977
    %v2174 = vpack.c.b16 %v1982, %v1978
    %v2175 = vpack.c.b16 %v1987, %v1983
    %v2176 = vpack.c.b16 %v1988, %v1984
    %v2177 = vpack.c.b16 %v1989, %v1985
    %v2178 = vpack.c.b16 %v1990, %v1986
    %v2179 = vpack.c.b16 %v1995, %v1991
    %v2180 = vpack.c.b16 %v1996, %v1992
    %v2181 = vpack.c.b16 %v1997, %v1993
    %v2182 = vpack.c.b16 %v1998, %v1994
    %v2183 = vpack.c.b16 %v2003, %v1999
    %v2184 = vpack.c.b16 %v2004, %v2000
    %v2185 = vpack.c.b16 %v2005, %v2001
    %v2186 = vpack.c.b16 %v2006, %v2002
    %v2187 = vpack.c.b16 %v2011, %v2007
    %v2188 = vpack.c.b16 %v2012, %v2008
    %v2189 = vpack.c.b16 %v2013, %v2009
    %v2190 = vpack.c.b16 %v2014, %v2010
    %v2191 = vpack.c.b16 %v2019, %v2015
    %v2192 = vpack.c.b16 %v2020, %v2016
    %v2193 = vpack.c.b16 %v2021, %v2017
    %v2194 = vpack.c.b16 %v2022, %v2018
    %v2195 = vpack.c.b16 %v2027, %v2023
    %v2196 = vpack.c.b16 %v2028, %v2024
    %v2197 = vpack.c.b16 %v2029, %v2025
    %v2198 = vpack.c.b16 %v2030, %v2026
    %v2199 = vpack.c.b16 %v2035, %v2031
    %v2200 = vpack.c.b16 %v2036, %v2032
    %v2201 = vpack.c.b16 %v2037, %v2033
    %v2202 = vpack.c.b16 %v2038, %v2034
    %v2203 = vpack.c.b16 %v2043, %v2039
    %v2204 = vpack.c.b16 %v2044, %v2040
    %v2205 = vpack.c.b16 %v2045, %v2041
    %v2206 = vpack.c.b16 %v2046, %v2042
    %v2207 = vpack.c.b16 %v2051, %v2047
    %v2208 = vpack.c.b16 %v2052, %v2048
    %v2209 = vpack.c.b16 %v2053, %v2049
    %v2210 = vpack.c.b16 %v2054, %v2050
    %v2211 = vpack.c.b16 %v2059, %v2055
    %v2212 = vpack.c.b16 %v2060, %v2056
    %v2213 = vpack.c.b16 %v2061, %v2057
    %v2214 = vpack.c.b16 %v2062, %v2058
    %v2215 = vpack.c.b16 %v2067, %v2063
    %v2216 = vpack.c.b16 %v2068, %v2064
    %v2217 = vpack.c.b16 %v2069, %v2065
    %v2218 = vpack.c.b16 %v2070, %v2066
    %v2219 = vpack.c.b16 %v2075, %v2071
    %v2220 = vpack.c.b16 %v2076, %v2072
    %v2221 = vpack.c.b16 %v2077, %v2073
    %v2222 = vpack.c.b16 %v2078, %v2074
    %v2223 = vpack.c.b16 %v2083, %v2079
    %v2224 = vpack.c.b16 %v2084, %v2080
    %v2225 = vpack.c.b16 %v2085, %v2081
    %v2226 = vpack.c.b16 %v2086, %v2082
    %v2227 = vpack.c.b16 %v2091, %v2087
    %v2228 = vpack.c.b16 %v2092, %v2088
    %v2229 = vpack.c.b16 %v2093, %v2089
    %v2230 = vpack.c.b16 %v2094, %v2090
    %v2231 = vpack.c.b16 %v2099, %v2095
    %v2232 = vpack.c.b16 %v2100, %v2096
    %v2233 = vpack.c.b16 %v2101, %v2097
    %v2234 = vpack.c.b16 %v2102, %v2098
    %v2235 = vpack.c.b16 %v2107, %v2103
    %v2236 = vpack.c.b16 %v2108, %v2104
    %v2237 = vpack.c.b16 %v2109, %v2105
    %v2238 = vpack.c.b16 %v2110, %v2106
    %2367 = vmatprep.subr.bf16.mxu0 %v2112
    %2368 = vmatpush1.bf16.msra.mxu0 %v2111
    %2369 = vmatprep.subr.bf16.mxu0 %v2116
    %2370 = vmatpush1.bf16.msra.mxu0 %v2115
    %2371 = vmatprep.subr.bf16.mxu0 %v2120
    %2372 = vmatpush1.bf16.msra.mxu0 %v2119
    %2373 = vmatprep.subr.bf16.mxu0 %v2124
    %2374 = vmatpush1.bf16.msra.mxu0 %v2123
    %2375 = vmatprep.subr.bf16.mxu0 %v2128
    %2376 = vmatpush1.bf16.msra.mxu0 %v2127
    %2377 = vmatprep.subr.bf16.mxu0 %v2132
    %2378 = vmatpush1.bf16.msra.mxu0 %v2131
    %2379 = vmatprep.subr.bf16.mxu0 %v2136
    %2380 = vmatpush1.bf16.msra.mxu0 %v2135
    %2381 = vmatprep.subr.bf16.mxu0 %v2140
    %2382 = vmatpush1.bf16.msra.mxu0 %v2139
    %2383 = vmatprep.subr.bf16.mxu0 %v2144
    %2384 = vmatpush1.bf16.msra.mxu0 %v2143
    %2385 = vmatprep.subr.bf16.mxu0 %v2148
    %2386 = vmatpush1.bf16.msra.mxu0 %v2147
    %2387 = vmatprep.subr.bf16.mxu0 %v2152
    %2388 = vmatpush1.bf16.msra.mxu0 %v2151
    %2389 = vmatprep.subr.bf16.mxu0 %v2156
    %2390 = vmatpush1.bf16.msra.mxu0 %v2155
    %2391 = vmatprep.subr.bf16.mxu0 %v2160
    %2392 = vmatpush1.bf16.msra.mxu0 %v2159
    %2393 = vmatprep.subr.bf16.mxu0 %v2164
    %2394 = vmatpush1.bf16.msra.mxu0 %v2163
    %2395 = vmatprep.subr.bf16.mxu0 %v2168
    %2396 = vmatpush1.bf16.msra.mxu0 %v2167
    %2397 = vmatprep.subr.bf16.mxu0 %v2172
    %2398 = vmatpush1.bf16.msra.mxu0 %v2171
    %2399 = vmatprep.mubr.bf16.mxu0 %v1574
    %2400 = vmatmul.mubr.bf16.gmra.mrb[0].mxu0 %v1573
    %v2401 = vpop.f32.mrb[0].mxu0
    %v2402 = vadd.f32 %v1710, %v2401
    %v2403 = vpop.f32.mrb[0].mxu0
    %v2404 = vadd.f32 %v1714, %v2403
    %v2405 = vpop.f32.mrb[0].mxu0
    %v2406 = vadd.f32 %v1710, %v2405
    %v2407 = vpop.f32.mrb[0].mxu0
    %v2408 = vadd.f32 %v1714, %v2407
    %2409 = vdwg.mxu0
    %2410 = vmatprep.subr.bf16.mxu0 %v2176
    %2411 = vmatpush1.bf16.msra.mxu0 %v2175
    %2412 = vmatprep.subr.bf16.mxu0 %v2180
    %2413 = vmatpush1.bf16.msra.mxu0 %v2179
    %2414 = vmatprep.subr.bf16.mxu0 %v2184
    %2415 = vmatpush1.bf16.msra.mxu0 %v2183
    %2416 = vmatprep.subr.bf16.mxu0 %v2188
    %2417 = vmatpush1.bf16.msra.mxu0 %v2187
    %2418 = vmatprep.subr.bf16.mxu0 %v2192
    %2419 = vmatpush1.bf16.msra.mxu0 %v2191
    %2420 = vmatprep.subr.bf16.mxu0 %v2196
    %2421 = vmatpush1.bf16.msra.mxu0 %v2195
    %2422 = vmatprep.subr.bf16.mxu0 %v2200
    %2423 = vmatpush1.bf16.msra.mxu0 %v2199
    %2424 = vmatprep.subr.bf16.mxu0 %v2204
    %2425 = vmatpush1.bf16.msra.mxu0 %v2203
    %2426 = vmatprep.subr.bf16.mxu0 %v2208
    %2427 = vmatpush1.bf16.msra.mxu0 %v2207
    %2428 = vmatprep.subr.bf16.mxu0 %v2212
    %2429 = vmatpush1.bf16.msra.mxu0 %v2211
    %2430 = vmatprep.subr.bf16.mxu0 %v2216
    %2431 = vmatpush1.bf16.msra.mxu0 %v2215
    %2432 = vmatprep.subr.bf16.mxu0 %v2220
    %2433 = vmatpush1.bf16.msra.mxu0 %v2219
    %2434 = vmatprep.subr.bf16.mxu0 %v2224
    %2435 = vmatpush1.bf16.msra.mxu0 %v2223
    %2436 = vmatprep.subr.bf16.mxu0 %v2228
    %2437 = vmatpush1.bf16.msra.mxu0 %v2227
    %2438 = vmatprep.subr.bf16.mxu0 %v2232
    %2439 = vmatpush1.bf16.msra.mxu0 %v2231
    %2440 = vmatprep.subr.bf16.mxu0 %v2236
    %2441 = vmatpush1.bf16.msra.mxu0 %v2235
    %2442 = vmatprep.mubr.bf16.mxu0 %v1576
    %2443 = vmatmul.mubr.bf16.gmra.mrb[0].mxu0 %v1575
    %v2444 = vpop.f32.mrb[0].mxu0
    %v2445 = vadd.f32 %v2402, %v2444
    %v2446 = vpop.f32.mrb[0].mxu0
    %v2447 = vadd.f32 %v2404, %v2446
    %v2448 = vpop.f32.mrb[0].mxu0
    %v2449 = vadd.f32 %v2406, %v2448
    %v2450 = vpop.f32.mrb[0].mxu0
    %v2451 = vadd.f32 %v2408, %v2450
    %2452 = vdwg.mxu0
    %2453 = vmatprep.subr.bf16.mxu0 %v2114
    %2454 = vmatpush1.bf16.msra.mxu0 %v2113
    %2455 = vmatprep.subr.bf16.mxu0 %v2118
    %2456 = vmatpush1.bf16.msra.mxu0 %v2117
    %2457 = vmatprep.subr.bf16.mxu0 %v2122
    %2458 = vmatpush1.bf16.msra.mxu0 %v2121
    %2459 = vmatprep.subr.bf16.mxu0 %v2126
    %2460 = vmatpush1.bf16.msra.mxu0 %v2125
    %2461 = vmatprep.subr.bf16.mxu0 %v2130
    %2462 = vmatpush1.bf16.msra.mxu0 %v2129
    %2463 = vmatprep.subr.bf16.mxu0 %v2134
    %2464 = vmatpush1.bf16.msra.mxu0 %v2133
    %2465 = vmatprep.subr.bf16.mxu0 %v2138
    %2466 = vmatpush1.bf16.msra.mxu0 %v2137
    %2467 = vmatprep.subr.bf16.mxu0 %v2142
    %2468 = vmatpush1.bf16.msra.mxu0 %v2141
    %2469 = vmatprep.subr.bf16.mxu0 %v2146
    %2470 = vmatpush1.bf16.msra.mxu0 %v2145
    %2471 = vmatprep.subr.bf16.mxu0 %v2150
    %2472 = vmatpush1.bf16.msra.mxu0 %v2149
    %2473 = vmatprep.subr.bf16.mxu0 %v2154
    %2474 = vmatpush1.bf16.msra.mxu0 %v2153
    %2475 = vmatprep.subr.bf16.mxu0 %v2158
    %2476 = vmatpush1.bf16.msra.mxu0 %v2157
    %2477 = vmatprep.subr.bf16.mxu0 %v2162
    %2478 = vmatpush1.bf16.msra.mxu0 %v2161
    %2479 = vmatprep.subr.bf16.mxu0 %v2166
    %2480 = vmatpush1.bf16.msra.mxu0 %v2165
    %2481 = vmatprep.subr.bf16.mxu0 %v2170
    %2482 = vmatpush1.bf16.msra.mxu0 %v2169
    %2483 = vmatprep.subr.bf16.mxu0 %v2174
    %2484 = vmatpush1.bf16.msra.mxu0 %v2173
    %2485 = vmatprep.mubr.bf16.mxu0 %v1574
    %2486 = vmatmul.mubr.bf16.gmra.mrb[0].mxu0 %v1573
    %v2487 = vpop.f32.mrb[0].mxu0
    %v2488 = vadd.f32 %v1718, %v2487
    %v2489 = vpop.f32.mrb[0].mxu0
    %v2490 = vadd.f32 %v1722, %v2489
    %v2491 = vpop.f32.mrb[0].mxu0
    %v2492 = vadd.f32 %v1718, %v2491
    %v2493 = vpop.f32.mrb[0].mxu0
    %v2494 = vadd.f32 %v1722, %v2493
    %2495 = vdwg.mxu0
    %2496 = vmatprep.subr.bf16.mxu0 %v2178
    %2497 = vmatpush1.bf16.msra.mxu0 %v2177
    %2498 = vmatprep.subr.bf16.mxu0 %v2182
    %2499 = vmatpush1.bf16.msra.mxu0 %v2181
    %2500 = vmatprep.subr.bf16.mxu0 %v2186
    %2501 = vmatpush1.bf16.msra.mxu0 %v2185
    %2502 = vmatprep.subr.bf16.mxu0 %v2190
    %2503 = vmatpush1.bf16.msra.mxu0 %v2189
    %2504 = vmatprep.subr.bf16.mxu0 %v2194
    %2505 = vmatpush1.bf16.msra.mxu0 %v2193
    %2506 = vmatprep.subr.bf16.mxu0 %v2198
    %2507 = vmatpush1.bf16.msra.mxu0 %v2197
    %2508 = vmatprep.subr.bf16.mxu0 %v2202
    %2509 = vmatpush1.bf16.msra.mxu0 %v2201
    %2510 = vmatprep.subr.bf16.mxu0 %v2206
    %2511 = vmatpush1.bf16.msra.mxu0 %v2205
    %2512 = vmatprep.subr.bf16.mxu0 %v2210
    %2513 = vmatpush1.bf16.msra.mxu0 %v2209
    %2514 = vmatprep.subr.bf16.mxu0 %v2214
    %2515 = vmatpush1.bf16.msra.mxu0 %v2213
    %2516 = vmatprep.subr.bf16.mxu0 %v2218
    %2517 = vmatpush1.bf16.msra.mxu0 %v2217
    %2518 = vmatprep.subr.bf16.mxu0 %v2222
    %2519 = vmatpush1.bf16.msra.mxu0 %v2221
    %2520 = vmatprep.subr.bf16.mxu0 %v2226
    %2521 = vmatpush1.bf16.msra.mxu0 %v2225
    %2522 = vmatprep.subr.bf16.mxu0 %v2230
    %2523 = vmatpush1.bf16.msra.mxu0 %v2229
    %2524 = vmatprep.subr.bf16.mxu0 %v2234
    %2525 = vmatpush1.bf16.msra.mxu0 %v2233
    %2526 = vmatprep.subr.bf16.mxu0 %v2238
    %2527 = vmatpush1.bf16.msra.mxu0 %v2237
    %2528 = vmatprep.mubr.bf16.mxu0 %v1576
    %2529 = vmatmul.mubr.bf16.gmra.mrb[0].mxu0 %v1575
    %v2530 = vpop.f32.mrb[0].mxu0
    %v2531 = vadd.f32 %v2488, %v2530
    %v2532 = vpop.f32.mrb[0].mxu0
    %v2533 = vadd.f32 %v2490, %v2532
    %v2534 = vpop.f32.mrb[0].mxu0
    %v2535 = vadd.f32 %v2492, %v2534
    %v2536 = vpop.f32.mrb[0].mxu0
    %v2537 = vadd.f32 %v2494, %v2536
    %2538 = vdwg.mxu0
    %v2539 = vmul.f32 %v2445, 0.5
    %v2540 = vmul.f32 %v2447, 0.5
    %v2541 = vmul.f32 %v2531, 0.5
    %v2542 = vmul.f32 %v2533, 0.5
    %v2543 = vmul.f32 %v2449, 0.5
    %v2544 = vmul.f32 %v2451, 0.5
    %v2545 = vmul.f32 %v2535, 0.5
    %v2546 = vmul.f32 %v2537, 0.5
    %v2547 = vmin.f32 %v2539, 20.0
    %v2548 = vmin.f32 %v2540, 20.0
    %v2549 = vmin.f32 %v2541, 20.0
    %v2550 = vmin.f32 %v2542, 20.0
    %v2551 = vmin.f32 %v2543, 20.0
    %v2552 = vmin.f32 %v2544, 20.0
    %v2553 = vmin.f32 %v2545, 20.0
    %v2554 = vmin.f32 %v2546, 20.0
    %vm2555 = vcmp.gt.f32.partialorder %v2539, 20.0
    %vm2556 = vcmp.gt.f32.partialorder %v2540, 20.0
    %vm2557 = vcmp.gt.f32.partialorder %v2541, 20.0
    %vm2558 = vcmp.gt.f32.partialorder %v2542, 20.0
    %vm2559 = vcmp.gt.f32.partialorder %v2543, 20.0
    %vm2560 = vcmp.gt.f32.partialorder %v2544, 20.0
    %vm2561 = vcmp.gt.f32.partialorder %v2545, 20.0
    %vm2562 = vcmp.gt.f32.partialorder %v2546, 20.0
    %v2563 = vmul.f32 %v2547, 1.442695
    %v2564 = vpow.pop %v2563
    %v2565 = vmul.f32 %v2548, 1.442695
    %v2566 = vpow.pop %v2565
    %v2567 = vmul.f32 %v2549, 1.442695
    %v2568 = vpow.pop %v2567
    %v2569 = vmul.f32 %v2550, 1.442695
    %v2570 = vpow.pop %v2569
    %v2571 = vmul.f32 %v2551, 1.442695
    %v2572 = vpow.pop %v2571
    %v2573 = vmul.f32 %v2552, 1.442695
    %v2574 = vpow.pop %v2573
    %v2575 = vmul.f32 %v2553, 1.442695
    %v2576 = vpow.pop %v2575
    %v2577 = vmul.f32 %v2554, 1.442695
    %v2578 = vpow.pop %v2577
    %v2579 = vadd.f32 %v2564, 1.0
    %v2580 = vlog2.pop %v2579
    %v2581 = vmul.f32 %v2580, 0.6931472
    %v2582 = vmul.f32 -0.5, %v2564
    %v2583 = vadd.f32 %v2582, 1.0
    %v2584 = vmul.f32 %v2583, %v2564
    %v2585 = vand.u32 2147483647, %v2564
    %vm2586 = vcmp.lt.f32.partialorder %v2585, 0.0004427343
    %v2587 = vsel %vm2586, %v2584, %v2581
    %v2588 = vadd.f32 %v2566, 1.0
    %v2589 = vlog2.pop %v2588
    %v2590 = vmul.f32 %v2589, 0.6931472
    %v2591 = vmul.f32 -0.5, %v2566
    %v2592 = vadd.f32 %v2591, 1.0
    %v2593 = vmul.f32 %v2592, %v2566
    %v2594 = vand.u32 2147483647, %v2566
    %vm2595 = vcmp.lt.f32.partialorder %v2594, 0.0004427343
    %v2596 = vsel %vm2595, %v2593, %v2590
    %v2597 = vadd.f32 %v2568, 1.0
    %v2598 = vlog2.pop %v2597
    %v2599 = vmul.f32 %v2598, 0.6931472
    %v2600 = vmul.f32 -0.5, %v2568
    %v2601 = vadd.f32 %v2600, 1.0
    %v2602 = vmul.f32 %v2601, %v2568
    %v2603 = vand.u32 2147483647, %v2568
    %vm2604 = vcmp.lt.f32.partialorder %v2603, 0.0004427343
    %v2605 = vsel %vm2604, %v2602, %v2599
    %v2606 = vadd.f32 %v2570, 1.0
    %v2607 = vlog2.pop %v2606
    %v2608 = vmul.f32 %v2607, 0.6931472
    %v2609 = vmul.f32 -0.5, %v2570
    %v2610 = vadd.f32 %v2609, 1.0
    %v2611 = vmul.f32 %v2610, %v2570
    %v2612 = vand.u32 2147483647, %v2570
    %vm2613 = vcmp.lt.f32.partialorder %v2612, 0.0004427343
    %v2614 = vsel %vm2613, %v2611, %v2608
    %v2615 = vadd.f32 %v2572, 1.0
    %v2616 = vlog2.pop %v2615
    %v2617 = vmul.f32 %v2616, 0.6931472
    %v2618 = vmul.f32 -0.5, %v2572
    %v2619 = vadd.f32 %v2618, 1.0
    %v2620 = vmul.f32 %v2619, %v2572
    %v2621 = vand.u32 2147483647, %v2572
    %vm2622 = vcmp.lt.f32.partialorder %v2621, 0.0004427343
    %v2623 = vsel %vm2622, %v2620, %v2617
    %v2624 = vadd.f32 %v2574, 1.0
    %v2625 = vlog2.pop %v2624
    %v2626 = vmul.f32 %v2625, 0.6931472
    %v2627 = vmul.f32 -0.5, %v2574
    %v2628 = vadd.f32 %v2627, 1.0
    %v2629 = vmul.f32 %v2628, %v2574
    %v2630 = vand.u32 2147483647, %v2574
    %vm2631 = vcmp.lt.f32.partialorder %v2630, 0.0004427343
    %v2632 = vsel %vm2631, %v2629, %v2626
    %v2633 = vadd.f32 %v2576, 1.0
    %v2634 = vlog2.pop %v2633
    %v2635 = vmul.f32 %v2634, 0.6931472
    %v2636 = vmul.f32 -0.5, %v2576
    %v2637 = vadd.f32 %v2636, 1.0
    %v2638 = vmul.f32 %v2637, %v2576
    %v2639 = vand.u32 2147483647, %v2576
    %vm2640 = vcmp.lt.f32.partialorder %v2639, 0.0004427343
    %v2641 = vsel %vm2640, %v2638, %v2635
    %v2642 = vadd.f32 %v2578, 1.0
    %v2643 = vlog2.pop %v2642
    %v2644 = vmul.f32 %v2643, 0.6931472
    %v2645 = vmul.f32 -0.5, %v2578
    %v2646 = vadd.f32 %v2645, 1.0
    %v2647 = vmul.f32 %v2646, %v2578
    %v2648 = vand.u32 2147483647, %v2578
    %vm2649 = vcmp.lt.f32.partialorder %v2648, 0.0004427343
    %v2650 = vsel %vm2649, %v2647, %v2644
    %v2651 = vmul.f32 %v2587, 2.0
    %v2652 = vmul.f32 %v2596, 2.0
    %v2653 = vmul.f32 %v2605, 2.0
    %v2654 = vmul.f32 %v2614, 2.0
    %v2655 = vmul.f32 %v2623, 2.0
    %v2656 = vmul.f32 %v2632, 2.0
    %v2657 = vmul.f32 %v2641, 2.0
    %v2658 = vmul.f32 %v2650, 2.0
    %v2659 = vsel %vm2555, %v2445, %v2651
    %v2660 = vsel %vm2556, %v2447, %v2652
    %v2661 = vsel %vm2557, %v2531, %v2653
    %v2662 = vsel %vm2558, %v2533, %v2654
    %v2663 = vsel %vm2559, %v2449, %v2655
    %v2664 = vsel %vm2560, %v2451, %v2656
    %v2665 = vsel %vm2561, %v2535, %v2657
    %v2666 = vsel %vm2562, %v2537, %v2658
    %v2667 = vld [vmem:[%s7] sm:$0xf]
    %v2669 = vlaneseq
    %v2670 = vshrl.u32 %v2669, 7
    %v2671 = vsub.s32 0, %v2670
    %v2672 = vrot.slane %v2667, %v2671
    %v2673 = vlaneseq
    %v2674 = vshrl.u32 %v2673, 7
    %v2675 = vsub.s32 1, %v2674
    %v2676 = vrot.slane %v2667, %v2675
    %v2677 = vlaneseq
    %v2678 = vshrl.u32 %v2677, 7
    %v2679 = vsub.s32 2, %v2678
    %v2680 = vrot.slane %v2667, %v2679
    %v2681 = vlaneseq
    %v2682 = vshrl.u32 %v2681, 7
    %v2683 = vsub.s32 3, %v2682
    %v2684 = vrot.slane %v2667, %v2683
    %v2689 = vmul.f32 %v2659, %v2672
    %v2690 = vmul.f32 %v2660, %v2676
    %v2691 = vmul.f32 %v2661, %v2680
    %v2692 = vmul.f32 %v2662, %v2684
    %v2693 = vmul.f32 %v2663, %v2672
    %v2694 = vmul.f32 %v2664, %v2676
    %v2695 = vmul.f32 %v2665, %v2680
    %v2696 = vmul.f32 %v2666, %v2684
    %v2697 = vadd.f32 %v2689, %v2690
    %v2698 = vadd.f32 %v2697, %v2691
    %v2699 = vadd.f32 %v2698, %v2692
    %2700 = vadd.xlane.f32.xlu0 %v2699
    %v2701 = vpop.xlane.xlu0 %2700
    %v2702 = vadd.f32 %v2693, %v2694
    %v2703 = vadd.f32 %v2702, %v2695
    %v2704 = vadd.f32 %v2703, %v2696
    %2705 = vadd.xlane.f32.xlu0 %v2704
    %v2706 = vpop.xlane.xlu0 %2705
    %v2707 = vld [vmem:[#allocation2] sm:$0x1]
    %v2709 = vlaneseq
    %v2710 = vshrl.u32 %v2709, 7
    %v2711 = vsub.s32 0, %v2710
    %v2712 = vrot.slane %v2707, %v2711
    %v2714 = vadd.f32 %v2701, %v2712
    %v2715 = vadd.f32 %v2706, %v2712
    %vm2716 = vcmask 7168
    %2717 = vst.msk [vmem:[%s9] sm:$0xff] %vm2716, %v2714
    %2718 = vst.msk [vmem:[%s9 + $0x8] sm:$0xff] %vm2716, %v2715
    // Predicated region
    $region50: #{discriminator_forward.1} parent=1 // pred_check
      _
    $region51: #{discriminator_forward.1} parent=1 // pred_check_branch
      %2720 = sbr.rel (0) target = $region53
    $region52: #{discriminator_forward.1} parent=1 // pred_region
      _
    $region53: #{discriminator_forward.1} parent=1 // pred_fallthru
      _
    // Predicated region
    $region54: #{discriminator_forward.1} parent=1 // pred_check
      _
    $region55: #{discriminator_forward.1} parent=1 // pred_check_branch
      %2722 = sbr.rel (0) target = $region57
    $region56: #{discriminator_forward.1} parent=1 // pred_region
      _
    $region57: #{discriminator_forward.1} parent=1 // pred_fallthru
      _
    %2723 = vsyncpa [#allocation4], 1
    %2724 = vsyncpa [#allocation6], 1

</llo_original>
